<compile_context>
chip_gen: v7x
topology: tpu7x:2x2x1
jax: 0.10.0
libtpu: 0.0.40
codegen_flags: <defaults>
</compile_context>

<pallas_src>
import math

import jax
import jax.numpy as jnp
import numpy as np
from jax.experimental import pallas as pl
from jax.experimental.pallas import tpu as pltpu

# ---- config (consistent with the module: HSIZE % 64 == 0) --------------------
HSIZE   = 128          # __C.HSIZE
HBASE   = 64           # fixed in SA.__init__
HHEAD   = HSIZE // HBASE
L_LAYER = 2            # DMHAtt l_layer (c is a list of L_LAYER tensors)
B       = 2
S       = 8
BS      = B * S
NEG     = -1e9         # same-batch padded key (torch masked_fill value)
NEG_XB  = -1.1e9       # cross-batch key (never visible to the torch per-batch attn)
EPS     = 1e-6


def _mm(a, b):
    # a @ b on the MXU with f32 accumulation
    return jax.lax.dot_general(a, b, (((a.ndim - 1,), (0,)), ((), ())),
                               preferred_element_type=jnp.float32)


def _mm_t(a, b):
    # a @ b.T (contract last dims) on the MXU with f32 accumulation
    return jax.lax.dot_general(a, b, (((1,), (1,)), ((), ())),
                               preferred_element_type=jnp.float32)


def _layernorm_kernel(x, a, b):
    # torch reference: a * (x - mean) / (x.std(unbiased) + eps) + b
    mean = jnp.mean(x, axis=-1, keepdims=True)
    d = x - mean
    var = jnp.sum(d * d, axis=-1, keepdims=True) * (1.0 / (HSIZE - 1))
    # exact divide here; approx reciprocal is reserved for the softmax denom
    return a * d / (jnp.sqrt(var) + EPS) + b


def _layernorm_ref(x, a, b):
    mean = jnp.mean(x, axis=-1, keepdims=True)
    var = jnp.sum((x - mean) ** 2, axis=-1, keepdims=True) / (x.shape[-1] - 1)
    return a * (x - mean) / (jnp.sqrt(var) + EPS) + b


# ------------------------------ kernel ---------------------------------------
# slab_a (bf16, (H, 8H))   : [ Wq | Wk | Wvm (2H, linear_merge pre-folded) | Wf1 (4H) ]
# slab_c (bf16, (2H, 2H))  : [ Wlin@Wuq | Wlin@Wuk ]  (lin_layer pre-folded)
# slab_b (bf16, (4H, H))   : Wf2
# small  (f32, (16, H))    : rows 0..3 tran_q/k/cq/ck, 4..7 ln1_a/ln1_b/ln2_a/
#                            ln2_b, 8 b_f2, 9..10 per-head lane masks
# bf1    (f32, (1, 4H))    : FFN hidden bias
# mv     (f32, (2*BS, BS)) : score mask values, already stacked per head
def sa_kernel(y_ref, c_ref, mv_ref, wa_ref, wc_ref, wb_ref, sm_ref, bf1_ref,
              out_ref):
    H, HB, NH = HSIZE, HBASE, HHEAD
    bf16 = jnp.bfloat16

    y = y_ref[...]                               # (BS, H) f32
    y16 = y.astype(bf16)
    c16 = c_ref[...].astype(bf16)                # (BS, 2H)

    # ---- fused q | k | merged-v projection (merge folded into Wv) -----------
    qkvm = _mm(y16, wa_ref[:, 0:(2 + NH) * H])   # (BS, 4H) f32
    q, k = qkvm[:, 0:H], qkvm[:, H:2 * H]
    vm = qkvm[:, 2 * H:(2 + NH) * H]             # (BS, 2H) pre-merged V

    # ---- context q/k: single matmul (lin_layer folded at pack time) ---------
    cqk = _mm(c16, wc_ref[...])                  # (BS, 2H)
    c_q, c_k = cqk[:, 0:H], cqk[:, H:2 * H]

    # ---- context gating: VPU mul + lane-sum (no N=1 MXU matmuls) ------------
    lam_q = jax.nn.sigmoid(jnp.sum(q * sm_ref[0:1, :] + c_q * sm_ref[2:3, :],
                                   axis=-1, keepdims=True))
    lam_k = jax.nn.sigmoid(jnp.sum(k * sm_ref[1:2, :] + c_k * sm_ref[3:4, :],
                                   axis=-1, keepdims=True))
    q = (1.0 - lam_q) * q + lam_q * c_q
    k = (1.0 - lam_k) * k + lam_k * c_k

    # ---- attention: both heads sublane-stacked -> 1 score matmul, 1 softmax -
    qs = q * (1.0 / math.sqrt(HB))
    q_stk = jnp.concatenate(
        [qs * sm_ref[9 + h:10 + h, :] for h in range(NH)], axis=0)  # (2BS, H)
    scores = _mm_t(q_stk.astype(bf16), k.astype(bf16))              # (2BS, BS)
    mv = mv_ref[...]
    scores = jnp.where(mv < -0.5, mv, scores)     # batch-block + key padding
    scores = scores - jnp.max(scores, axis=-1, keepdims=True)
    e = jnp.exp(scores)
    p = (e * pl.reciprocal(jnp.sum(e, axis=-1, keepdims=True),
                           approx=True)).astype(bf16)

    # AV against lane-disjoint pre-merged V halves (no separate merge matmul)
    att = _mm(p[0:BS, :], vm[:, 0:H].astype(bf16))
    for h in range(1, NH):
        att = att + _mm(p[h * BS:(h + 1) * BS, :],
                        vm[:, h * H:(h + 1) * H].astype(bf16))

    # ---- residual + norm1 (dropout1 = identity in eval) ----------------------
    x1 = _layernorm_kernel(y + att, sm_ref[4:5, :], sm_ref[5:6, :])

    # ---- FFN (Linear -> ReLU -> Linear) --------------------------------------
    hid = jnp.maximum(
        _mm(x1.astype(bf16), wa_ref[:, (2 + NH) * H:(6 + NH) * H]) + bf1_ref[...],
        0.0)
    ffn = _mm(hid.astype(bf16), wb_ref[...]) + sm_ref[8:9, :]

    # ---- residual + norm2 (dropout2 = identity in eval) ----------------------
    out_ref[...] = _layernorm_kernel(x1 + ffn, sm_ref[6:7, :], sm_ref[7:8, :])


# ------------------------------ packing ---------------------------------------
def pack_params(params):
    """Pack the 19 module parameters into lane-dense slabs (done once)."""
    (w_lin, w_v, w_k, w_q, w_uk, w_uq, w_tq, w_tk, w_tcq, w_tck,
     w_merge, ln1_a, ln1_b, w_f1, b_f1, w_f2, b_f2, ln2_a, ln2_b) = params

    # fold linear_merge into linear_v per head (same bytes/FLOPs, one fewer matmul)
    wvm = jnp.concatenate(
        [w_v[:, h * HBASE:(h + 1) * HBASE] @ w_merge[h * HBASE:(h + 1) * HBASE, :]
         for h in range(HHEAD)], axis=1)                               # (H, 2H)
    slab_a = jnp.concatenate([w_q, w_k, wvm, w_f1],
                             axis=1).astype(jnp.bfloat16)              # (H, 8H)

    # fold lin_layer into lin_uq / lin_uk (kills the serial c -> cqk dependency)
    slab_c = jnp.concatenate([w_lin @ w_uq, w_lin @ w_uk],
                             axis=1).astype(jnp.bfloat16)              # (2H, 2H)

    slab_b = w_f2.astype(jnp.bfloat16)                                 # (4H, H)

    lane = np.arange(HSIZE)
    small = jnp.zeros((16, HSIZE), jnp.float32)
    small = (small.at[0].set(w_tq[:, 0]).at[1].set(w_tk[:, 0])
                  .at[2].set(w_tcq[:, 0]).at[3].set(w_tck[:, 0])
                  .at[4].set(ln1_a[0]).at[5].set(ln1_b[0])
                  .at[6].set(ln2_a[0]).at[7].set(ln2_b[0])
                  .at[8].set(b_f2[0]))
    for h in range(HHEAD):
        small = small.at[9 + h].set(
            jnp.asarray((lane // HBASE) == h, jnp.float32))            # head masks
    return slab_a, slab_c, slab_b, small, b_f1


# ------------------------------ wrapper ---------------------------------------
def sa_forward(y, mask_f, c_cat, packed):
    slab_a, slab_c, slab_b, small, b_f1 = packed
    Bq, Sq, Hq = y.shape
    bs = Bq * Sq
    y2d = y.reshape(bs, Hq)
    c2d = c_cat.reshape(bs, c_cat.shape[-1])

    # Precompute the stacked score-mask values on the XLA side:
    #   0      -> attend
    #   NEG    -> same batch, padded key (matches torch masked_fill)
    #   NEG_XB -> different batch (strictly below NEG so fully-masked rows
    #             still softmax only over their own batch, like torch)
    batch_id = jnp.arange(bs) // Sq
    same = batch_id[:, None] == batch_id[None, :]
    key_masked = mask_f.reshape(bs) > 0.5
    mv = jnp.where(same & key_masked[None, :], NEG, 0.0)
    mv = jnp.where(~same, NEG_XB, mv)
    mv = jnp.tile(mv, (HHEAD, 1)).astype(jnp.float32)        # (HHEAD*bs, bs)

    vmem = pl.BlockSpec(memory_space=pltpu.MemorySpace.VMEM)
    out2d = pl.pallas_call(
        sa_kernel,
        out_shape=jax.ShapeDtypeStruct((bs, Hq), jnp.float32),
        in_specs=[vmem] * 8,
        out_specs=vmem,
    )(y2d, c2d, mv, slab_a, slab_c, slab_b, small, b_f1)
    return out2d.reshape(Bq, Sq, Hq)


# ---- pure-JAX f32 reference (for correctness check) --------------------------
def sa_ref(y, mask_f, c_cat, params):
    (w_lin, w_v, w_k, w_q, w_uk, w_uq, w_tq, w_tk, w_tcq, w_tck,
     w_merge, ln1_a, ln1_b, w_f1, b_f1, w_f2, b_f2, ln2_a, ln2_b) = params

    c = c_cat @ w_lin
    v = y @ w_v
    c_k, c_q = c @ w_uk, c @ w_uq
    k, q = y @ w_k, y @ w_q
    lam_q = jax.nn.sigmoid(q @ w_tq + c_q @ w_tcq)
    lam_k = jax.nn.sigmoid(k @ w_tk + c_k @ w_tck)
    q = (1 - lam_q) * q + lam_q * c_q
    k = (1 - lam_k) * k + lam_k * c_k

    def split(x):
        return x.reshape(B, S, HHEAD, HBASE).transpose(0, 2, 1, 3)

    qh, kh, vh = split(q), split(k), split(v)
    scores = jnp.einsum("bhqd,bhkd->bhqk", qh, kh) / math.sqrt(HBASE)
    scores = jnp.where(mask_f[:, :, None, :] > 0.5, NEG, scores)
    p = jax.nn.softmax(scores, axis=-1)
    att = jnp.einsum("bhqk,bhkd->bhqd", p, vh)
    att = att.transpose(0, 2, 1, 3).reshape(B, S, HSIZE) @ w_merge

    x1 = _layernorm_ref(y + att, ln1_a, ln1_b)
    ffn = jnp.maximum(x1 @ w_f1 + b_f1, 0.0) @ w_f2 + b_f2
    return _layernorm_ref(x1 + ffn, ln2_a, ln2_b)


def init_params(key):
    ks = list(jax.random.split(key, 16))

    def lin(k, fan_in, fan_out):
        return (jax.random.normal(k, (fan_in, fan_out), jnp.float32)
                / math.sqrt(fan_in))

    w_lin = lin(ks[0], HSIZE * L_LAYER, HSIZE)   # lin_layer (bias=False)
    w_v = lin(ks[1], HSIZE, HSIZE)               # linear_v
    w_k = lin(ks[2], HSIZE, HSIZE)               # linear_k
    w_q = lin(ks[3], HSIZE, HSIZE)               # linear_q
    w_uk = lin(ks[4], HSIZE, HSIZE)              # lin_uk
    w_uq = lin(ks[5], HSIZE, HSIZE)              # lin_uq
    w_tq = lin(ks[6], HSIZE, 1)                  # tran_q
    w_tk = lin(ks[7], HSIZE, 1)                  # tran_k
    w_tcq = lin(ks[8], HSIZE, 1)                 # tran_cq
    w_tck = lin(ks[9], HSIZE, 1)                 # tran_ck
    w_merge = lin(ks[10], HSIZE, HSIZE)          # linear_merge
    ln1_a = jnp.ones((1, HSIZE), jnp.float32)    # LayerNorm a_2
    ln1_b = jnp.zeros((1, HSIZE), jnp.float32)   # LayerNorm b_2
    w_f1 = lin(ks[11], HSIZE, 4 * HSIZE)         # FFN FC linear (bias=True)
    b_f1 = 0.01 * jax.random.normal(ks[12], (1, 4 * HSIZE), jnp.float32)
    w_f2 = lin(ks[13], 4 * HSIZE, HSIZE)         # FFN out linear (bias=True)
    b_f2 = 0.01 * jax.random.normal(ks[14], (1, HSIZE), jnp.float32)
    ln2_a = jnp.ones((1, HSIZE), jnp.float32)
    ln2_b = jnp.zeros((1, HSIZE), jnp.float32)

    return (w_lin, w_v, w_k, w_q, w_uk, w_uq, w_tq, w_tk, w_tcq, w_tck,
            w_merge, ln1_a, ln1_b, w_f1, b_f1, w_f2, b_f2, ln2_a, ln2_b)


if __name__ == "__main__":
    key = jax.random.PRNGKey(0)
    k_y, k_c0, k_c1, k_p = jax.random.split(key, 4)

    y = jax.random.normal(k_y, (B, S, HSIZE), jnp.float32)
    # c is a list of L_LAYER per-layer features (deep context); concat is glue.
    c_list = [jax.random.normal(k_c0, (B, S, HSIZE), jnp.float32),
              jax.random.normal(k_c1, (B, S, HSIZE), jnp.float32)]
    c_cat = jnp.concatenate(c_list, axis=-1)

    # key-padding mask: 1.0 = masked; batch 1 has its last 2 keys masked.
    mask_f = jnp.zeros((B, 1, S), jnp.float32).at[1, 0, S - 2:].set(1.0)

    params = init_params(k_p)
    packed = pack_params(params)               # one-time weight packing/folding

    out = jax.jit(sa_forward)(y, mask_f, c_cat, packed)
    out = jax.block_until_ready(out)

    ref = sa_ref(y, mask_f, c_cat, params)
    # tolerance covers bf16-MXU drift vs the all-f32 reference; structural bugs
    # would produce O(0.1+) errors and still be caught.
    np.testing.assert_allclose(np.asarray(out), np.asarray(ref),
                               rtol=2e-2, atol=3e-2)

    print("KERNEL_OK")
</pallas_src>

<mosaic_0001>
module attributes {stable_mosaic.version = 11 : i64} {
  func.func @sa_kernel(%arg0: memref<16x128xf32, #tpu.memory_space<vmem>>, %arg1: memref<16x256xf32, #tpu.memory_space<vmem>>, %arg2: memref<32x16xf32, #tpu.memory_space<vmem>>, %arg3: memref<128x1024xbf16, #tpu.memory_space<vmem>>, %arg4: memref<256x256xbf16, #tpu.memory_space<vmem>>, %arg5: memref<512x128xbf16, #tpu.memory_space<vmem>>, %arg6: memref<16x128xf32, #tpu.memory_space<vmem>>, %arg7: memref<1x512xf32, #tpu.memory_space<vmem>>, %arg8: memref<16x128xf32, #tpu.memory_space<vmem>>) attributes {dimension_semantics = [], scalar_prefetch = 0 : i64, scratch_operands = 0 : i64, tpu.core_type = #tpu.core_type<tc>} {
    %c0 = arith.constant 0 : index
    %c0_0 = arith.constant 0 : index
    %0 = vector.load %arg0[%c0, %c0_0] : memref<16x128xf32, #tpu.memory_space<vmem>>, vector<16x128xf32>
    %1 = arith.truncf %0 : vector<16x128xf32> to vector<16x128xbf16>
    %c0_1 = arith.constant 0 : index
    %c0_2 = arith.constant 0 : index
    %2 = vector.load %arg1[%c0_1, %c0_2] : memref<16x256xf32, #tpu.memory_space<vmem>>, vector<16x256xf32>
    %3 = arith.truncf %2 : vector<16x256xf32> to vector<16x256xbf16>
    %c0_3 = arith.constant 0 : index
    %c0_4 = arith.constant 0 : index
    %4 = vector.load %arg3[%c0_3, %c0_4] : memref<128x1024xbf16, #tpu.memory_space<vmem>>, vector<128x512xbf16>
    %cst = arith.constant dense<0.000000e+00> : vector<16x512xf32>
    %5 = tpu.matmul %1, %4, %cst {dimension_numbers = #tpu.dot_dimension_numbers<[1], [0], [0], [1], [0, 0, 1, 1], [], []>} : vector<16x128xbf16>, vector<128x512xbf16>, vector<16x512xf32> -> vector<16x512xf32>
    %6 = vector.extract_strided_slice %5 {offsets = [0, 0], sizes = [16, 128], strides = [1, 1]} : vector<16x512xf32> to vector<16x128xf32>
    %7 = vector.extract_strided_slice %5 {offsets = [0, 128], sizes = [16, 128], strides = [1, 1]} : vector<16x512xf32> to vector<16x128xf32>
    %8 = vector.extract_strided_slice %5 {offsets = [0, 256], sizes = [16, 256], strides = [1, 1]} : vector<16x512xf32> to vector<16x256xf32>
    %c0_5 = arith.constant 0 : index
    %c0_6 = arith.constant 0 : index
    %9 = vector.load %arg4[%c0_5, %c0_6] : memref<256x256xbf16, #tpu.memory_space<vmem>>, vector<256x256xbf16>
    %cst_7 = arith.constant dense<0.000000e+00> : vector<16x256xf32>
    %10 = tpu.matmul %3, %9, %cst_7 {dimension_numbers = #tpu.dot_dimension_numbers<[1], [0], [0], [1], [0, 0, 1, 1], [], []>} : vector<16x256xbf16>, vector<256x256xbf16>, vector<16x256xf32> -> vector<16x256xf32>
    %11 = vector.extract_strided_slice %10 {offsets = [0, 0], sizes = [16, 128], strides = [1, 1]} : vector<16x256xf32> to vector<16x128xf32>
    %12 = vector.extract_strided_slice %10 {offsets = [0, 128], sizes = [16, 128], strides = [1, 1]} : vector<16x256xf32> to vector<16x128xf32>
    %c0_8 = arith.constant 0 : index
    %c0_9 = arith.constant 0 : index
    %13 = vector.load %arg6[%c0_8, %c0_9] : memref<16x128xf32, #tpu.memory_space<vmem>>, vector<1x128xf32>
    %14 = vector.broadcast %13 : vector<1x128xf32> to vector<16x128xf32>
    %15 = arith.mulf %6, %14 : vector<16x128xf32>
    %c2 = arith.constant 2 : index
    %c0_10 = arith.constant 0 : index
    %16 = vector.load %arg6[%c2, %c0_10] : memref<16x128xf32, #tpu.memory_space<vmem>>, vector<1x128xf32>
    %17 = vector.broadcast %16 : vector<1x128xf32> to vector<16x128xf32>
    %18 = arith.mulf %11, %17 : vector<16x128xf32>
    %19 = arith.addf %15, %18 : vector<16x128xf32>
    %cst_11 = arith.constant dense<0.000000e+00> : vector<16xf32>
    %20 = vector.multi_reduction <add>, %19, %cst_11 [1] : vector<16x128xf32> to vector<16xf32>
    %21 = vector.shape_cast %20 : vector<16xf32> to vector<16x1xf32>
    %22 = arith.negf %21 : vector<16x1xf32>
    %23 = math.exp %22 : vector<16x1xf32>
    %cst_12 = arith.constant 1.000000e+00 : f32
    %24 = vector.broadcast %cst_12 : f32 to vector<16x1xf32>
    %25 = arith.addf %24, %23 : vector<16x1xf32>
    %26 = arith.divf %24, %25 : vector<16x1xf32>
    %c1 = arith.constant 1 : index
    %c0_13 = arith.constant 0 : index
    %27 = vector.load %arg6[%c1, %c0_13] : memref<16x128xf32, #tpu.memory_space<vmem>>, vector<1x128xf32>
    %28 = vector.broadcast %27 : vector<1x128xf32> to vector<16x128xf32>
    %29 = arith.mulf %7, %28 : vector<16x128xf32>
    %c3 = arith.constant 3 : index
    %c0_14 = arith.constant 0 : index
    %30 = vector.load %arg6[%c3, %c0_14] : memref<16x128xf32, #tpu.memory_space<vmem>>, vector<1x128xf32>
    %31 = vector.broadcast %30 : vector<1x128xf32> to vector<16x128xf32>
    %32 = arith.mulf %12, %31 : vector<16x128xf32>
    %33 = arith.addf %29, %32 : vector<16x128xf32>
    %cst_15 = arith.constant dense<0.000000e+00> : vector<16xf32>
    %34 = vector.multi_reduction <add>, %33, %cst_15 [1] : vector<16x128xf32> to vector<16xf32>
    %35 = vector.shape_cast %34 : vector<16xf32> to vector<16x1xf32>
    %36 = arith.negf %35 : vector<16x1xf32>
    %37 = math.exp %36 : vector<16x1xf32>
    %cst_16 = arith.constant 1.000000e+00 : f32
    %38 = vector.broadcast %cst_16 : f32 to vector<16x1xf32>
    %39 = arith.addf %38, %37 : vector<16x1xf32>
    %40 = arith.divf %38, %39 : vector<16x1xf32>
    %cst_17 = arith.constant 1.000000e+00 : f32
    %41 = vector.broadcast %cst_17 : f32 to vector<16x1xf32>
    %42 = arith.subf %41, %26 : vector<16x1xf32>
    %43 = vector.broadcast %42 : vector<16x1xf32> to vector<16x128xf32>
    %44 = arith.mulf %43, %6 : vector<16x128xf32>
    %45 = vector.broadcast %26 : vector<16x1xf32> to vector<16x128xf32>
    %46 = arith.mulf %45, %11 : vector<16x128xf32>
    %47 = arith.addf %44, %46 : vector<16x128xf32>
    %cst_18 = arith.constant 1.000000e+00 : f32
    %48 = vector.broadcast %cst_18 : f32 to vector<16x1xf32>
    %49 = arith.subf %48, %40 : vector<16x1xf32>
    %50 = vector.broadcast %49 : vector<16x1xf32> to vector<16x128xf32>
    %51 = arith.mulf %50, %7 : vector<16x128xf32>
    %52 = vector.broadcast %40 : vector<16x1xf32> to vector<16x128xf32>
    %53 = arith.mulf %52, %12 : vector<16x128xf32>
    %54 = arith.addf %51, %53 : vector<16x128xf32>
    %cst_19 = arith.constant 1.250000e-01 : f32
    %55 = vector.broadcast %cst_19 : f32 to vector<16x128xf32>
    %56 = arith.mulf %47, %55 : vector<16x128xf32>
    %c9 = arith.constant 9 : index
    %c0_20 = arith.constant 0 : index
    %57 = vector.load %arg6[%c9, %c0_20] : memref<16x128xf32, #tpu.memory_space<vmem>>, vector<1x128xf32>
    %58 = vector.broadcast %57 : vector<1x128xf32> to vector<16x128xf32>
    %59 = arith.mulf %56, %58 : vector<16x128xf32>
    %c10 = arith.constant 10 : index
    %c0_21 = arith.constant 0 : index
    %60 = vector.load %arg6[%c10, %c0_21] : memref<16x128xf32, #tpu.memory_space<vmem>>, vector<1x128xf32>
    %61 = vector.broadcast %60 : vector<1x128xf32> to vector<16x128xf32>
    %62 = arith.mulf %56, %61 : vector<16x128xf32>
    %63 = tpu.concatenate %59, %62 in 0 : vector<16x128xf32>, vector<16x128xf32> -> vector<32x128xf32>
    %64 = arith.truncf %63 : vector<32x128xf32> to vector<32x128xbf16>
    %65 = arith.truncf %54 : vector<16x128xf32> to vector<16x128xbf16>
    %cst_22 = arith.constant dense<0.000000e+00> : vector<32x16xf32>
    %66 = tpu.matmul %64, %65, %cst_22 {dimension_numbers = #tpu.dot_dimension_numbers<[1], [1], [0], [0], [0, 0, 1, 0], [], []>} : vector<32x128xbf16>, vector<16x128xbf16>, vector<32x16xf32> -> vector<32x16xf32>
    %c0_23 = arith.constant 0 : index
    %c0_24 = arith.constant 0 : index
    %67 = vector.load %arg2[%c0_23, %c0_24] : memref<32x16xf32, #tpu.memory_space<vmem>>, vector<32x16xf32>
    %cst_25 = arith.constant -5.000000e-01 : f32
    %68 = vector.broadcast %cst_25 : f32 to vector<32x16xf32>
    %69 = arith.cmpf olt, %67, %68 : vector<32x16xf32>
    %70 = arith.select %69, %67, %66 : vector<32x16xi1>, vector<32x16xf32>
    %cst_26 = arith.constant dense<0xFF800000> : vector<32xf32>
    %71 = vector.multi_reduction <maximumf>, %70, %cst_26 [1] : vector<32x16xf32> to vector<32xf32>
    %72 = vector.shape_cast %71 : vector<32xf32> to vector<32x1xf32>
    %73 = vector.broadcast %72 : vector<32x1xf32> to vector<32x16xf32>
    %74 = arith.subf %70, %73 : vector<32x16xf32>
    %75 = math.exp %74 : vector<32x16xf32>
    %cst_27 = arith.constant dense<0.000000e+00> : vector<32xf32>
    %76 = vector.multi_reduction <add>, %75, %cst_27 [1] : vector<32x16xf32> to vector<32xf32>
    %77 = vector.shape_cast %76 : vector<32xf32> to vector<32x1xf32>
    %78 = tpu.reciprocal %77 {approx = true} : vector<32x1xf32> -> vector<32x1xf32>
    %79 = vector.broadcast %78 : vector<32x1xf32> to vector<32x16xf32>
    %80 = arith.mulf %75, %79 : vector<32x16xf32>
    %81 = arith.truncf %80 : vector<32x16xf32> to vector<32x16xbf16>
    %82 = vector.extract_strided_slice %81 {offsets = [0, 0], sizes = [16, 16], strides = [1, 1]} : vector<32x16xbf16> to vector<16x16xbf16>
    %83 = vector.extract_strided_slice %8 {offsets = [0, 0], sizes = [16, 128], strides = [1, 1]} : vector<16x256xf32> to vector<16x128xf32>
    %84 = arith.truncf %83 : vector<16x128xf32> to vector<16x128xbf16>
    %cst_28 = arith.constant dense<0.000000e+00> : vector<16x128xf32>
    %85 = tpu.matmul %82, %84, %cst_28 {dimension_numbers = #tpu.dot_dimension_numbers<[1], [0], [0], [1], [0, 0, 1, 1], [], []>} : vector<16x16xbf16>, vector<16x128xbf16>, vector<16x128xf32> -> vector<16x128xf32>
    %86 = vector.extract_strided_slice %81 {offsets = [16, 0], sizes = [16, 16], strides = [1, 1]} : vector<32x16xbf16> to vector<16x16xbf16>
    %87 = vector.extract_strided_slice %8 {offsets = [0, 128], sizes = [16, 128], strides = [1, 1]} : vector<16x256xf32> to vector<16x128xf32>
    %88 = arith.truncf %87 : vector<16x128xf32> to vector<16x128xbf16>
    %cst_29 = arith.constant dense<0.000000e+00> : vector<16x128xf32>
    %89 = tpu.matmul %86, %88, %cst_29 {dimension_numbers = #tpu.dot_dimension_numbers<[1], [0], [0], [1], [0, 0, 1, 1], [], []>} : vector<16x16xbf16>, vector<16x128xbf16>, vector<16x128xf32> -> vector<16x128xf32>
    %90 = arith.addf %85, %89 : vector<16x128xf32>
    %91 = arith.addf %0, %90 : vector<16x128xf32>
    %c4 = arith.constant 4 : index
    %c0_30 = arith.constant 0 : index
    %92 = vector.load %arg6[%c4, %c0_30] : memref<16x128xf32, #tpu.memory_space<vmem>>, vector<1x128xf32>
    %c5 = arith.constant 5 : index
    %c0_31 = arith.constant 0 : index
    %93 = vector.load %arg6[%c5, %c0_31] : memref<16x128xf32, #tpu.memory_space<vmem>>, vector<1x128xf32>
    %cst_32 = arith.constant dense<0.000000e+00> : vector<16xf32>
    %94 = vector.multi_reduction <add>, %91, %cst_32 [1] : vector<16x128xf32> to vector<16xf32>
    %95 = vector.shape_cast %94 : vector<16xf32> to vector<16x1xf32>
    %cst_33 = arith.constant 1.280000e+02 : f32
    %96 = vector.broadcast %cst_33 : f32 to vector<16x1xf32>
    %97 = arith.divf %95, %96 : vector<16x1xf32>
    %98 = vector.broadcast %97 : vector<16x1xf32> to vector<16x128xf32>
    %99 = arith.subf %91, %98 : vector<16x128xf32>
    %100 = arith.mulf %99, %99 : vector<16x128xf32>
    %cst_34 = arith.constant dense<0.000000e+00> : vector<16xf32>
    %101 = vector.multi_reduction <add>, %100, %cst_34 [1] : vector<16x128xf32> to vector<16xf32>
    %102 = vector.shape_cast %101 : vector<16xf32> to vector<16x1xf32>
    %cst_35 = arith.constant 0.00787401571 : f32
    %103 = vector.broadcast %cst_35 : f32 to vector<16x1xf32>
    %104 = arith.mulf %102, %103 : vector<16x1xf32>
    %105 = vector.broadcast %92 : vector<1x128xf32> to vector<16x128xf32>
    %106 = arith.mulf %105, %99 : vector<16x128xf32>
    %107 = math.sqrt %104 : vector<16x1xf32>
    %cst_36 = arith.constant 9.99999997E-7 : f32
    %108 = vector.broadcast %cst_36 : f32 to vector<16x1xf32>
    %109 = arith.addf %107, %108 : vector<16x1xf32>
    %110 = vector.broadcast %109 : vector<16x1xf32> to vector<16x128xf32>
    %111 = arith.divf %106, %110 : vector<16x128xf32>
    %112 = vector.broadcast %93 : vector<1x128xf32> to vector<16x128xf32>
    %113 = arith.addf %111, %112 : vector<16x128xf32>
    %114 = arith.truncf %113 : vector<16x128xf32> to vector<16x128xbf16>
    %c0_37 = arith.constant 0 : index
    %c512 = arith.constant 512 : index
    %115 = vector.load %arg3[%c0_37, %c512] : memref<128x1024xbf16, #tpu.memory_space<vmem>>, vector<128x512xbf16>
    %cst_38 = arith.constant dense<0.000000e+00> : vector<16x512xf32>
    %116 = tpu.matmul %114, %115, %cst_38 {dimension_numbers = #tpu.dot_dimension_numbers<[1], [0], [0], [1], [0, 0, 1, 1], [], []>} : vector<16x128xbf16>, vector<128x512xbf16>, vector<16x512xf32> -> vector<16x512xf32>
    %c0_39 = arith.constant 0 : index
    %c0_40 = arith.constant 0 : index
    %117 = vector.load %arg7[%c0_39, %c0_40] : memref<1x512xf32, #tpu.memory_space<vmem>>, vector<1x512xf32>
    %118 = vector.broadcast %117 : vector<1x512xf32> to vector<16x512xf32>
    %119 = arith.addf %116, %118 : vector<16x512xf32>
    %cst_41 = arith.constant 0.000000e+00 : f32
    %120 = vector.broadcast %cst_41 : f32 to vector<16x512xf32>
    %121 = arith.maximumf %119, %120 : vector<16x512xf32>
    %122 = arith.truncf %121 : vector<16x512xf32> to vector<16x512xbf16>
    %c0_42 = arith.constant 0 : index
    %c0_43 = arith.constant 0 : index
    %123 = vector.load %arg5[%c0_42, %c0_43] : memref<512x128xbf16, #tpu.memory_space<vmem>>, vector<512x128xbf16>
    %cst_44 = arith.constant dense<0.000000e+00> : vector<16x128xf32>
    %124 = tpu.matmul %122, %123, %cst_44 {dimension_numbers = #tpu.dot_dimension_numbers<[1], [0], [0], [1], [0, 0, 1, 1], [], []>} : vector<16x512xbf16>, vector<512x128xbf16>, vector<16x128xf32> -> vector<16x128xf32>
    %c8 = arith.constant 8 : index
    %c0_45 = arith.constant 0 : index
    %125 = vector.load %arg6[%c8, %c0_45] : memref<16x128xf32, #tpu.memory_space<vmem>>, vector<1x128xf32>
    %126 = vector.broadcast %125 : vector<1x128xf32> to vector<16x128xf32>
    %127 = arith.addf %124, %126 : vector<16x128xf32>
    %128 = arith.addf %113, %127 : vector<16x128xf32>
    %c6 = arith.constant 6 : index
    %c0_46 = arith.constant 0 : index
    %129 = vector.load %arg6[%c6, %c0_46] : memref<16x128xf32, #tpu.memory_space<vmem>>, vector<1x128xf32>
    %c7 = arith.constant 7 : index
    %c0_47 = arith.constant 0 : index
    %130 = vector.load %arg6[%c7, %c0_47] : memref<16x128xf32, #tpu.memory_space<vmem>>, vector<1x128xf32>
    %cst_48 = arith.constant dense<0.000000e+00> : vector<16xf32>
    %131 = vector.multi_reduction <add>, %128, %cst_48 [1] : vector<16x128xf32> to vector<16xf32>
    %132 = vector.shape_cast %131 : vector<16xf32> to vector<16x1xf32>
    %cst_49 = arith.constant 1.280000e+02 : f32
    %133 = vector.broadcast %cst_49 : f32 to vector<16x1xf32>
    %134 = arith.divf %132, %133 : vector<16x1xf32>
    %135 = vector.broadcast %134 : vector<16x1xf32> to vector<16x128xf32>
    %136 = arith.subf %128, %135 : vector<16x128xf32>
    %137 = arith.mulf %136, %136 : vector<16x128xf32>
    %cst_50 = arith.constant dense<0.000000e+00> : vector<16xf32>
    %138 = vector.multi_reduction <add>, %137, %cst_50 [1] : vector<16x128xf32> to vector<16xf32>
    %139 = vector.shape_cast %138 : vector<16xf32> to vector<16x1xf32>
    %cst_51 = arith.constant 0.00787401571 : f32
    %140 = vector.broadcast %cst_51 : f32 to vector<16x1xf32>
    %141 = arith.mulf %139, %140 : vector<16x1xf32>
    %142 = vector.broadcast %129 : vector<1x128xf32> to vector<16x128xf32>
    %143 = arith.mulf %142, %136 : vector<16x128xf32>
    %144 = math.sqrt %141 : vector<16x1xf32>
    %cst_52 = arith.constant 9.99999997E-7 : f32
    %145 = vector.broadcast %cst_52 : f32 to vector<16x1xf32>
    %146 = arith.addf %144, %145 : vector<16x1xf32>
    %147 = vector.broadcast %146 : vector<16x1xf32> to vector<16x128xf32>
    %148 = arith.divf %143, %147 : vector<16x128xf32>
    %149 = vector.broadcast %130 : vector<1x128xf32> to vector<16x128xf32>
    %150 = arith.addf %148, %149 : vector<16x128xf32>
    %c0_53 = arith.constant 0 : index
    %c0_54 = arith.constant 0 : index
    %151 = vector.load %arg8[%c0_53, %c0_54] : memref<16x128xf32, #tpu.memory_space<vmem>>, vector<16x128xf32>
    tpu.vector_store %arg8[%c0_53, %c0_54], %150 {strides = array<i32>} : memref<16x128xf32, #tpu.memory_space<vmem>>, vector<16x128xf32>,
    return
  }
}

</mosaic_0001>

<llo_original>
// kernel: sa_forward.1
$region0: #{sa_forward.1}
  #allocation0 [shape = 'u32[]', space=smem, size = 0x4, offset = 0x4, fixed_abs, tag = 'smem constant byte address 0x4 - core index']
  #allocation1 [shape = 'u32[144,128]{1,0:T(1,128)}', space=vmem, size = 0x12000, scoped, tag = 'internal scratch']
  %s0 = inlined_call_operand.vmem [shape: f32[16,128], index: 0, kind: input, shape index: {}]
  %s1 = inlined_call_operand.vmem [shape: f32[16,256], index: 1, kind: input, shape index: {}]
  %s2 = inlined_call_operand.vmem [shape: f32[32,16], index: 2, kind: input, shape index: {}]
  %s3 = inlined_call_operand.hbm [shape: bf16[128,1024], index: 3, kind: input, shape index: {}]
  %s4 = inlined_call_operand.hbm [shape: bf16[256,256], index: 4, kind: input, shape index: {}]
  %s5 = inlined_call_operand.hbm [shape: bf16[512,128], index: 5, kind: input, shape index: {}]
  %s6 = inlined_call_operand.vmem [shape: f32[16,128], index: 6, kind: input, shape index: {}]
  %s7 = inlined_call_operand.vmem [shape: f32[1,512], index: 7, kind: input, shape index: {}]
  %s8 = inlined_call_operand.hbm [shape: f32[16,128], index: 8, kind: output, shape index: {}]
  %s9 = sld [smem:[#allocation0]]
  $region54: #{sa_forward.1} parent=0
    _
  %s11 = ssub.s32 1, %s9
  %s12 = scalar_select 0, %s11, %s9
  $region1: #{sa_forward.1} parent=0
    #allocation2 [shape = 'u8[262144]{0}', space=vmem, size = 0x40000, scoped, tag = 'input window, operand 3, single buffered']
    #allocation3 [shape = 's32[1]{0}', space=sflag, size = 0x4, scoped, tag = 'scoped memory for sa_forward.1']
    #allocation4 [shape = 's32[1]{0}', space=sflag, size = 0x4, scoped, tag = 'scoped memory for sa_forward.1']
    #allocation5 [shape = 'u8[131072]{0}', space=vmem, size = 0x20000, scoped, tag = 'input window, operand 4, single buffered']
    #allocation6 [shape = 's32[1]{0}', space=sflag, size = 0x4, scoped, tag = 'scoped memory for sa_forward.1']
    #allocation7 [shape = 'u8[131072]{0}', space=vmem, size = 0x20000, scoped, tag = 'input window, operand 5, single buffered']
    #allocation8 [shape = 'u8[8192]{0}', space=vmem, size = 0x2000, scoped, tag = 'output window, operand 0, single buffered']
    %13 = vsyncpa [#allocation3], 0
    %14 = vsyncpa [#allocation6], 0
    %15 = vsyncpa [#allocation4], 0
    // Predicated region
    $region2: #{sa_forward.1} parent=1 // pred_check
      _
    $region3: #{sa_forward.1} parent=1 // pred_check_branch
      %17 = sbr.rel (0) target = $region5
    $region4: #{sa_forward.1} parent=1 // pred_region
      _
    $region5: #{sa_forward.1} parent=1 // pred_fallthru
      _
    // Predicated region
    $region6: #{sa_forward.1} parent=1 // pred_check
      _
    $region7: #{sa_forward.1} parent=1 // pred_check_branch
      %19 = sbr.rel (0) target = $region9
    $region8: #{sa_forward.1} parent=1 // pred_region
      _
    $region9: #{sa_forward.1} parent=1 // pred_fallthru
      _
    // Predicated region
    $region10: #{sa_forward.1} parent=1 // pred_check
      _
    $region11: #{sa_forward.1} parent=1 // pred_check_branch
      %21 = sbr.rel (0) target = $region13
    $region12: #{sa_forward.1} parent=1 // pred_region
      _
    $region13: #{sa_forward.1} parent=1 // pred_fallthru
      _
    // Predicated region
    $region14: #{sa_forward.1} parent=1 // pred_check
      _
    $region15: #{sa_forward.1} parent=1 // pred_check_branch
      %23 = sbr.rel (0) target = $region17
    $region16: #{sa_forward.1} parent=1 // pred_region
      %s25 = ssub.s32 8192, 8192
      %26 = vsyncadd [#allocation3], %s25
      %s27 = sshll.u32 [#allocation2], 4
      %s28 = int_to_ptr.vmem [resolvable:$true] %s27
      %33 = dma.hbm_to_vmem [thread:$0]  %s3, 8192, %s28, [#allocation3], 512, 512, 32
    $region17: #{sa_forward.1} parent=1 // pred_fallthru
      _
    // Predicated region
    $region18: #{sa_forward.1} parent=1 // pred_check
      _
    $region19: #{sa_forward.1} parent=1 // pred_check_branch
      %35 = sbr.rel (0) target = $region21
    $region20: #{sa_forward.1} parent=1 // pred_region
      %s37 = ssub.s32 4096, 4096
      %38 = vsyncadd [#allocation6], %s37
      %s39 = sshll.u32 [#allocation5], 4
      %s40 = int_to_ptr.vmem [resolvable:$true] %s39
      %45 = dma.hbm_to_vmem [thread:$0]  %s4, 4096, %s40, [#allocation6], 128, 128, 8
    $region21: #{sa_forward.1} parent=1 // pred_fallthru
      _
    // Predicated region
    $region22: #{sa_forward.1} parent=1 // pred_check
      _
    $region23: #{sa_forward.1} parent=1 // pred_check_branch
      %47 = sbr.rel (0) target = $region25
    $region24: #{sa_forward.1} parent=1 // pred_region
      %s49 = ssub.s32 4096, 4096
      %50 = vsyncadd [#allocation6], %s49
      %s51 = sshll.u32 [#allocation7], 4
      %s52 = int_to_ptr.vmem [resolvable:$true] %s51
      %57 = dma.hbm_to_vmem [thread:$0]  %s5, 4096, %s52, [#allocation6], 64, 64, 4
    $region25: #{sa_forward.1} parent=1 // pred_fallthru
      _
    // Predicated region
    $region26: #{sa_forward.1} parent=1 // pred_check
      _
    $region27: #{sa_forward.1} parent=1 // pred_check_branch
      %59 = sbr.rel (0) target = $region29
    $region28: #{sa_forward.1} parent=1 // pred_region
      _
    $region29: #{sa_forward.1} parent=1 // pred_fallthru
      _
    // Predicated region
    $region30: #{sa_forward.1} parent=1 // pred_check
      _
    $region31: #{sa_forward.1} parent=1 // pred_check_branch
      %61 = sbr.rel (0) target = $region33
    $region32: #{sa_forward.1} parent=1 // pred_region
      _
    $region33: #{sa_forward.1} parent=1 // pred_fallthru
      _
    // Predicated region
    $region34: #{sa_forward.1} parent=1 // pred_check
      _
    $region35: #{sa_forward.1} parent=1 // pred_check_branch
      %63 = sbr.rel (0) target = $region37
    $region36: #{sa_forward.1} parent=1 // pred_region
      %64 = dma.done [#allocation3], 8192
    $region37: #{sa_forward.1} parent=1 // pred_fallthru
      _
    // Predicated region
    $region38: #{sa_forward.1} parent=1 // pred_check
      _
    $region39: #{sa_forward.1} parent=1 // pred_check_branch
      %66 = sbr.rel (0) target = $region41
    $region40: #{sa_forward.1} parent=1 // pred_region
      %67 = dma.done [#allocation6], 4096
    $region41: #{sa_forward.1} parent=1 // pred_fallthru
      _
    // Predicated region
    $region42: #{sa_forward.1} parent=1 // pred_check
      _
    $region43: #{sa_forward.1} parent=1 // pred_check_branch
      %69 = sbr.rel (0) target = $region45
    $region44: #{sa_forward.1} parent=1 // pred_region
      %70 = dma.done [#allocation6], 4096
    $region45: #{sa_forward.1} parent=1 // pred_fallthru
      _
    %v72 = vld [vmem:[%s0] sm:$0xff]
    %v73 = vld [vmem:[%s0 + $0x8] sm:$0xff]
    %v74 = vpack.c.bf16 %v73, %v72
    %v75 = vld [vmem:[%s1] sm:$0xff]
    %v76 = vld [vmem:[%s1 + $0x8] sm:$0xff]
    %v77 = vld [vmem:[%s1 + $0x10] sm:$0xff]
    %v78 = vld [vmem:[%s1 + $0x18] sm:$0xff]
    %v79 = vpack.c.bf16 %v77, %v75
    %v80 = vpack.c.bf16 %v78, %v76
    %v81 = vld [vmem:[#allocation2] sm:$0xff]
    %v82 = vld [vmem:[#allocation2 + $0x8] sm:$0xff]
    %v83 = vld [vmem:[#allocation2 + $0x20] sm:$0xff]
    %v84 = vld [vmem:[#allocation2 + $0x28] sm:$0xff]
    %v85 = vld [vmem:[#allocation2 + $0x40] sm:$0xff]
    %v86 = vld [vmem:[#allocation2 + $0x48] sm:$0xff]
    %v87 = vld [vmem:[#allocation2 + $0x60] sm:$0xff]
    %v88 = vld [vmem:[#allocation2 + $0x68] sm:$0xff]
    %v89 = vld [vmem:[#allocation2 + $0x80] sm:$0xff]
    %v90 = vld [vmem:[#allocation2 + $0x88] sm:$0xff]
    %v91 = vld [vmem:[#allocation2 + $0xa0] sm:$0xff]
    %v92 = vld [vmem:[#allocation2 + $0xa8] sm:$0xff]
    %v93 = vld [vmem:[#allocation2 + $0xc0] sm:$0xff]
    %v94 = vld [vmem:[#allocation2 + $0xc8] sm:$0xff]
    %v95 = vld [vmem:[#allocation2 + $0xe0] sm:$0xff]
    %v96 = vld [vmem:[#allocation2 + $0xe8] sm:$0xff]
    %v97 = vld [vmem:[#allocation2 + $0x100] sm:$0xff]
    %v98 = vld [vmem:[#allocation2 + $0x108] sm:$0xff]
    %v99 = vld [vmem:[#allocation2 + $0x120] sm:$0xff]
    %v100 = vld [vmem:[#allocation2 + $0x128] sm:$0xff]
    %v101 = vld [vmem:[#allocation2 + $0x140] sm:$0xff]
    %v102 = vld [vmem:[#allocation2 + $0x148] sm:$0xff]
    %v103 = vld [vmem:[#allocation2 + $0x160] sm:$0xff]
    %v104 = vld [vmem:[#allocation2 + $0x168] sm:$0xff]
    %v105 = vld [vmem:[#allocation2 + $0x180] sm:$0xff]
    %v106 = vld [vmem:[#allocation2 + $0x188] sm:$0xff]
    %v107 = vld [vmem:[#allocation2 + $0x1a0] sm:$0xff]
    %v108 = vld [vmem:[#allocation2 + $0x1a8] sm:$0xff]
    %v109 = vld [vmem:[#allocation2 + $0x1c0] sm:$0xff]
    %v110 = vld [vmem:[#allocation2 + $0x1c8] sm:$0xff]
    %v111 = vld [vmem:[#allocation2 + $0x1e0] sm:$0xff]
    %v112 = vld [vmem:[#allocation2 + $0x1e8] sm:$0xff]
    %v145 = vunpack.c.l.b16 %v81
    %v146 = vunpack.c.h.b16 %v81
    %v147 = vunpack.c.l.b16 %v82
    %v148 = vunpack.c.h.b16 %v82
    %v149 = vunpack.c.l.b16 %v83
    %v150 = vunpack.c.h.b16 %v83
    %v151 = vunpack.c.l.b16 %v84
    %v152 = vunpack.c.h.b16 %v84
    %v153 = vunpack.c.l.b16 %v85
    %v154 = vunpack.c.h.b16 %v85
    %v155 = vunpack.c.l.b16 %v86
    %v156 = vunpack.c.h.b16 %v86
    %v157 = vunpack.c.l.b16 %v87
    %v158 = vunpack.c.h.b16 %v87
    %v159 = vunpack.c.l.b16 %v88
    %v160 = vunpack.c.h.b16 %v88
    %v161 = vunpack.c.l.b16 %v89
    %v162 = vunpack.c.h.b16 %v89
    %v163 = vunpack.c.l.b16 %v90
    %v164 = vunpack.c.h.b16 %v90
    %v165 = vunpack.c.l.b16 %v91
    %v166 = vunpack.c.h.b16 %v91
    %v167 = vunpack.c.l.b16 %v92
    %v168 = vunpack.c.h.b16 %v92
    %v169 = vunpack.c.l.b16 %v93
    %v170 = vunpack.c.h.b16 %v93
    %v171 = vunpack.c.l.b16 %v94
    %v172 = vunpack.c.h.b16 %v94
    %v173 = vunpack.c.l.b16 %v95
    %v174 = vunpack.c.h.b16 %v95
    %v175 = vunpack.c.l.b16 %v96
    %v176 = vunpack.c.h.b16 %v96
    %v177 = vunpack.c.l.b16 %v97
    %v178 = vunpack.c.h.b16 %v97
    %v179 = vunpack.c.l.b16 %v98
    %v180 = vunpack.c.h.b16 %v98
    %v181 = vunpack.c.l.b16 %v99
    %v182 = vunpack.c.h.b16 %v99
    %v183 = vunpack.c.l.b16 %v100
    %v184 = vunpack.c.h.b16 %v100
    %v185 = vunpack.c.l.b16 %v101
    %v186 = vunpack.c.h.b16 %v101
    %v187 = vunpack.c.l.b16 %v102
    %v188 = vunpack.c.h.b16 %v102
    %v189 = vunpack.c.l.b16 %v103
    %v190 = vunpack.c.h.b16 %v103
    %v191 = vunpack.c.l.b16 %v104
    %v192 = vunpack.c.h.b16 %v104
    %v193 = vunpack.c.l.b16 %v105
    %v194 = vunpack.c.h.b16 %v105
    %v195 = vunpack.c.l.b16 %v106
    %v196 = vunpack.c.h.b16 %v106
    %v197 = vunpack.c.l.b16 %v107
    %v198 = vunpack.c.h.b16 %v107
    %v199 = vunpack.c.l.b16 %v108
    %v200 = vunpack.c.h.b16 %v108
    %v201 = vunpack.c.l.b16 %v109
    %v202 = vunpack.c.h.b16 %v109
    %v203 = vunpack.c.l.b16 %v110
    %v204 = vunpack.c.h.b16 %v110
    %v205 = vunpack.c.l.b16 %v111
    %v206 = vunpack.c.h.b16 %v111
    %v207 = vunpack.c.l.b16 %v112
    %v208 = vunpack.c.h.b16 %v112
    %v209 = vpack.c.b16 %v149, %v145
    %v210 = vpack.c.b16 %v150, %v146
    %v211 = vpack.c.b16 %v151, %v147
    %v212 = vpack.c.b16 %v152, %v148
    %v213 = vpack.c.b16 %v157, %v153
    %v214 = vpack.c.b16 %v158, %v154
    %v215 = vpack.c.b16 %v159, %v155
    %v216 = vpack.c.b16 %v160, %v156
    %v217 = vpack.c.b16 %v165, %v161
    %v218 = vpack.c.b16 %v166, %v162
    %v219 = vpack.c.b16 %v167, %v163
    %v220 = vpack.c.b16 %v168, %v164
    %v221 = vpack.c.b16 %v173, %v169
    %v222 = vpack.c.b16 %v174, %v170
    %v223 = vpack.c.b16 %v175, %v171
    %v224 = vpack.c.b16 %v176, %v172
    %v225 = vpack.c.b16 %v181, %v177
    %v226 = vpack.c.b16 %v182, %v178
    %v227 = vpack.c.b16 %v183, %v179
    %v228 = vpack.c.b16 %v184, %v180
    %v229 = vpack.c.b16 %v189, %v185
    %v230 = vpack.c.b16 %v190, %v186
    %v231 = vpack.c.b16 %v191, %v187
    %v232 = vpack.c.b16 %v192, %v188
    %v233 = vpack.c.b16 %v197, %v193
    %v234 = vpack.c.b16 %v198, %v194
    %v235 = vpack.c.b16 %v199, %v195
    %v236 = vpack.c.b16 %v200, %v196
    %v237 = vpack.c.b16 %v205, %v201
    %v238 = vpack.c.b16 %v206, %v202
    %v239 = vpack.c.b16 %v207, %v203
    %v240 = vpack.c.b16 %v208, %v204
    %273 = vmatprep.subr.bf16.mxu0 %v210
    %274 = vmatpush1.bf16.msra.mxu0 %v209
    %275 = vmatprep.subr.bf16.mxu0 %v214
    %276 = vmatpush1.bf16.msra.mxu0 %v213
    %277 = vmatprep.subr.bf16.mxu0 %v218
    %278 = vmatpush1.bf16.msra.mxu0 %v217
    %279 = vmatprep.subr.bf16.mxu0 %v222
    %280 = vmatpush1.bf16.msra.mxu0 %v221
    %281 = vmatprep.subr.bf16.mxu0 %v226
    %282 = vmatpush1.bf16.msra.mxu0 %v225
    %283 = vmatprep.subr.bf16.mxu0 %v230
    %284 = vmatpush1.bf16.msra.mxu0 %v229
    %285 = vmatprep.subr.bf16.mxu0 %v234
    %286 = vmatpush1.bf16.msra.mxu0 %v233
    %287 = vmatprep.subr.bf16.mxu0 %v238
    %288 = vmatpush1.bf16.msra.mxu0 %v237
    %289 = vmatprep.subr.bf16.mxu0 0
    %290 = vmatpush1.bf16.msra.mxu0 0
    %291 = vmatprep.subr.bf16.mxu0 0
    %292 = vmatpush1.bf16.msra.mxu0 0
    %293 = vmatprep.subr.bf16.mxu0 0
    %294 = vmatpush1.bf16.msra.mxu0 0
    %295 = vmatprep.subr.bf16.mxu0 0
    %296 = vmatpush1.bf16.msra.mxu0 0
    %297 = vmatprep.subr.bf16.mxu0 0
    %298 = vmatpush1.bf16.msra.mxu0 0
    %299 = vmatprep.subr.bf16.mxu0 0
    %300 = vmatpush1.bf16.msra.mxu0 0
    %301 = vmatprep.subr.bf16.mxu0 0
    %302 = vmatpush1.bf16.msra.mxu0 0
    %303 = vmatprep.subr.bf16.mxu0 0
    %304 = vmatpush1.bf16.msra.mxu0 0
    %305 = vmatprep.mubr.bf16.mxu0 0
    %306 = vmatmul.mubr.bf16.gmra.mrb[0].mxu0 %v74
    %v307 = vpop.f32.mrb[0].mxu0
    %v308 = vadd.f32 0.0, %v307
    %v309 = vpop.f32.mrb[0].mxu0
    %v310 = vadd.f32 0.0, %v309
    %v311 = vpop.f32.mrb[0].mxu0
    %v312 = vadd.f32 0.0, %v311
    %v313 = vpop.f32.mrb[0].mxu0
    %v314 = vadd.f32 0.0, %v313
    %315 = vdwg.mxu0
    %316 = vmatprep.subr.bf16.mxu0 %v212
    %317 = vmatpush1.bf16.msra.mxu0 %v211
    %318 = vmatprep.subr.bf16.mxu0 %v216
    %319 = vmatpush1.bf16.msra.mxu0 %v215
    %320 = vmatprep.subr.bf16.mxu0 %v220
    %321 = vmatpush1.bf16.msra.mxu0 %v219
    %322 = vmatprep.subr.bf16.mxu0 %v224
    %323 = vmatpush1.bf16.msra.mxu0 %v223
    %324 = vmatprep.subr.bf16.mxu0 %v228
    %325 = vmatpush1.bf16.msra.mxu0 %v227
    %326 = vmatprep.subr.bf16.mxu0 %v232
    %327 = vmatpush1.bf16.msra.mxu0 %v231
    %328 = vmatprep.subr.bf16.mxu0 %v236
    %329 = vmatpush1.bf16.msra.mxu0 %v235
    %330 = vmatprep.subr.bf16.mxu0 %v240
    %331 = vmatpush1.bf16.msra.mxu0 %v239
    %332 = vmatprep.subr.bf16.mxu0 0
    %333 = vmatpush1.bf16.msra.mxu0 0
    %334 = vmatprep.subr.bf16.mxu0 0
    %335 = vmatpush1.bf16.msra.mxu0 0
    %336 = vmatprep.subr.bf16.mxu0 0
    %337 = vmatpush1.bf16.msra.mxu0 0
    %338 = vmatprep.subr.bf16.mxu0 0
    %339 = vmatpush1.bf16.msra.mxu0 0
    %340 = vmatprep.subr.bf16.mxu0 0
    %341 = vmatpush1.bf16.msra.mxu0 0
    %342 = vmatprep.subr.bf16.mxu0 0
    %343 = vmatpush1.bf16.msra.mxu0 0
    %344 = vmatprep.subr.bf16.mxu0 0
    %345 = vmatpush1.bf16.msra.mxu0 0
    %346 = vmatprep.subr.bf16.mxu0 0
    %347 = vmatpush1.bf16.msra.mxu0 0
    %348 = vmatprep.mubr.bf16.mxu0 0
    %349 = vmatmul.mubr.bf16.gmra.mrb[0].mxu0 %v74
    %v350 = vpop.f32.mrb[0].mxu0
    %v351 = vadd.f32 0.0, %v350
    %v352 = vpop.f32.mrb[0].mxu0
    %v353 = vadd.f32 0.0, %v352
    %v354 = vpop.f32.mrb[0].mxu0
    %v355 = vadd.f32 0.0, %v354
    %v356 = vpop.f32.mrb[0].mxu0
    %v357 = vadd.f32 0.0, %v356
    %358 = vdwg.mxu0
    %v359 = vld [vmem:[#allocation5] sm:$0xff]
    %v360 = vld [vmem:[#allocation5 + $0x8] sm:$0xff]
    %v361 = vld [vmem:[#allocation5 + $0x10] sm:$0xff]
    %v362 = vld [vmem:[#allocation5 + $0x18] sm:$0xff]
    %v363 = vld [vmem:[#allocation5 + $0x20] sm:$0xff]
    %v364 = vld [vmem:[#allocation5 + $0x28] sm:$0xff]
    %v365 = vld [vmem:[#allocation5 + $0x30] sm:$0xff]
    %v366 = vld [vmem:[#allocation5 + $0x38] sm:$0xff]
    %v367 = vld [vmem:[#allocation5 + $0x40] sm:$0xff]
    %v368 = vld [vmem:[#allocation5 + $0x48] sm:$0xff]
    %v369 = vld [vmem:[#allocation5 + $0x50] sm:$0xff]
    %v370 = vld [vmem:[#allocation5 + $0x58] sm:$0xff]
    %v371 = vld [vmem:[#allocation5 + $0x60] sm:$0xff]
    %v372 = vld [vmem:[#allocation5 + $0x68] sm:$0xff]
    %v373 = vld [vmem:[#allocation5 + $0x70] sm:$0xff]
    %v374 = vld [vmem:[#allocation5 + $0x78] sm:$0xff]
    %v375 = vld [vmem:[#allocation5 + $0x80] sm:$0xff]
    %v376 = vld [vmem:[#allocation5 + $0x88] sm:$0xff]
    %v377 = vld [vmem:[#allocation5 + $0x90] sm:$0xff]
    %v378 = vld [vmem:[#allocation5 + $0x98] sm:$0xff]
    %v379 = vld [vmem:[#allocation5 + $0xa0] sm:$0xff]
    %v380 = vld [vmem:[#allocation5 + $0xa8] sm:$0xff]
    %v381 = vld [vmem:[#allocation5 + $0xb0] sm:$0xff]
    %v382 = vld [vmem:[#allocation5 + $0xb8] sm:$0xff]
    %v383 = vld [vmem:[#allocation5 + $0xc0] sm:$0xff]
    %v384 = vld [vmem:[#allocation5 + $0xc8] sm:$0xff]
    %v385 = vld [vmem:[#allocation5 + $0xd0] sm:$0xff]
    %v386 = vld [vmem:[#allocation5 + $0xd8] sm:$0xff]
    %v387 = vld [vmem:[#allocation5 + $0xe0] sm:$0xff]
    %v388 = vld [vmem:[#allocation5 + $0xe8] sm:$0xff]
    %v389 = vld [vmem:[#allocation5 + $0xf0] sm:$0xff]
    %v390 = vld [vmem:[#allocation5 + $0xf8] sm:$0xff]
    %v423 = vunpack.c.l.b16 %v359
    %v424 = vunpack.c.h.b16 %v359
    %v425 = vunpack.c.l.b16 %v360
    %v426 = vunpack.c.h.b16 %v360
    %v427 = vunpack.c.l.b16 %v361
    %v428 = vunpack.c.h.b16 %v361
    %v429 = vunpack.c.l.b16 %v362
    %v430 = vunpack.c.h.b16 %v362
    %v431 = vunpack.c.l.b16 %v363
    %v432 = vunpack.c.h.b16 %v363
    %v433 = vunpack.c.l.b16 %v364
    %v434 = vunpack.c.h.b16 %v364
    %v435 = vunpack.c.l.b16 %v365
    %v436 = vunpack.c.h.b16 %v365
    %v437 = vunpack.c.l.b16 %v366
    %v438 = vunpack.c.h.b16 %v366
    %v439 = vunpack.c.l.b16 %v367
    %v440 = vunpack.c.h.b16 %v367
    %v441 = vunpack.c.l.b16 %v368
    %v442 = vunpack.c.h.b16 %v368
    %v443 = vunpack.c.l.b16 %v369
    %v444 = vunpack.c.h.b16 %v369
    %v445 = vunpack.c.l.b16 %v370
    %v446 = vunpack.c.h.b16 %v370
    %v447 = vunpack.c.l.b16 %v371
    %v448 = vunpack.c.h.b16 %v371
    %v449 = vunpack.c.l.b16 %v372
    %v450 = vunpack.c.h.b16 %v372
    %v451 = vunpack.c.l.b16 %v373
    %v452 = vunpack.c.h.b16 %v373
    %v453 = vunpack.c.l.b16 %v374
    %v454 = vunpack.c.h.b16 %v374
    %v455 = vunpack.c.l.b16 %v375
    %v456 = vunpack.c.h.b16 %v375
    %v457 = vunpack.c.l.b16 %v376
    %v458 = vunpack.c.h.b16 %v376
    %v459 = vunpack.c.l.b16 %v377
    %v460 = vunpack.c.h.b16 %v377
    %v461 = vunpack.c.l.b16 %v378
    %v462 = vunpack.c.h.b16 %v378
    %v463 = vunpack.c.l.b16 %v379
    %v464 = vunpack.c.h.b16 %v379
    %v465 = vunpack.c.l.b16 %v380
    %v466 = vunpack.c.h.b16 %v380
    %v467 = vunpack.c.l.b16 %v381
    %v468 = vunpack.c.h.b16 %v381
    %v469 = vunpack.c.l.b16 %v382
    %v470 = vunpack.c.h.b16 %v382
    %v471 = vunpack.c.l.b16 %v383
    %v472 = vunpack.c.h.b16 %v383
    %v473 = vunpack.c.l.b16 %v384
    %v474 = vunpack.c.h.b16 %v384
    %v475 = vunpack.c.l.b16 %v385
    %v476 = vunpack.c.h.b16 %v385
    %v477 = vunpack.c.l.b16 %v386
    %v478 = vunpack.c.h.b16 %v386
    %v479 = vunpack.c.l.b16 %v387
    %v480 = vunpack.c.h.b16 %v387
    %v481 = vunpack.c.l.b16 %v388
    %v482 = vunpack.c.h.b16 %v388
    %v483 = vunpack.c.l.b16 %v389
    %v484 = vunpack.c.h.b16 %v389
    %v485 = vunpack.c.l.b16 %v390
    %v486 = vunpack.c.h.b16 %v390
    %v487 = vpack.c.b16 %v425, %v423
    %v488 = vpack.c.b16 %v426, %v424
    %v489 = vpack.c.b16 %v429, %v427
    %v490 = vpack.c.b16 %v430, %v428
    %v491 = vpack.c.b16 %v433, %v431
    %v492 = vpack.c.b16 %v434, %v432
    %v493 = vpack.c.b16 %v437, %v435
    %v494 = vpack.c.b16 %v438, %v436
    %v495 = vpack.c.b16 %v441, %v439
    %v496 = vpack.c.b16 %v442, %v440
    %v497 = vpack.c.b16 %v445, %v443
    %v498 = vpack.c.b16 %v446, %v444
    %v499 = vpack.c.b16 %v449, %v447
    %v500 = vpack.c.b16 %v450, %v448
    %v501 = vpack.c.b16 %v453, %v451
    %v502 = vpack.c.b16 %v454, %v452
    %v503 = vpack.c.b16 %v457, %v455
    %v504 = vpack.c.b16 %v458, %v456
    %v505 = vpack.c.b16 %v461, %v459
    %v506 = vpack.c.b16 %v462, %v460
    %v507 = vpack.c.b16 %v465, %v463
    %v508 = vpack.c.b16 %v466, %v464
    %v509 = vpack.c.b16 %v469, %v467
    %v510 = vpack.c.b16 %v470, %v468
    %v511 = vpack.c.b16 %v473, %v471
    %v512 = vpack.c.b16 %v474, %v472
    %v513 = vpack.c.b16 %v477, %v475
    %v514 = vpack.c.b16 %v478, %v476
    %v515 = vpack.c.b16 %v481, %v479
    %v516 = vpack.c.b16 %v482, %v480
    %v517 = vpack.c.b16 %v485, %v483
    %v518 = vpack.c.b16 %v486, %v484
    %551 = vmatprep.subr.bf16.mxu0 %v488
    %552 = vmatpush1.bf16.msra.mxu0 %v487
    %553 = vmatprep.subr.bf16.mxu0 %v490
    %554 = vmatpush1.bf16.msra.mxu0 %v489
    %555 = vmatprep.subr.bf16.mxu0 %v492
    %556 = vmatpush1.bf16.msra.mxu0 %v491
    %557 = vmatprep.subr.bf16.mxu0 %v494
    %558 = vmatpush1.bf16.msra.mxu0 %v493
    %559 = vmatprep.subr.bf16.mxu0 %v496
    %560 = vmatpush1.bf16.msra.mxu0 %v495
    %561 = vmatprep.subr.bf16.mxu0 %v498
    %562 = vmatpush1.bf16.msra.mxu0 %v497
    %563 = vmatprep.subr.bf16.mxu0 %v500
    %564 = vmatpush1.bf16.msra.mxu0 %v499
    %565 = vmatprep.subr.bf16.mxu0 %v502
    %566 = vmatpush1.bf16.msra.mxu0 %v501
    %567 = vmatprep.subr.bf16.mxu0 %v504
    %568 = vmatpush1.bf16.msra.mxu0 %v503
    %569 = vmatprep.subr.bf16.mxu0 %v506
    %570 = vmatpush1.bf16.msra.mxu0 %v505
    %571 = vmatprep.subr.bf16.mxu0 %v508
    %572 = vmatpush1.bf16.msra.mxu0 %v507
    %573 = vmatprep.subr.bf16.mxu0 %v510
    %574 = vmatpush1.bf16.msra.mxu0 %v509
    %575 = vmatprep.subr.bf16.mxu0 %v512
    %576 = vmatpush1.bf16.msra.mxu0 %v511
    %577 = vmatprep.subr.bf16.mxu0 %v514
    %578 = vmatpush1.bf16.msra.mxu0 %v513
    %579 = vmatprep.subr.bf16.mxu0 %v516
    %580 = vmatpush1.bf16.msra.mxu0 %v515
    %581 = vmatprep.subr.bf16.mxu0 %v518
    %582 = vmatpush1.bf16.msra.mxu0 %v517
    %583 = vmatprep.mubr.bf16.mxu0 %v80
    %584 = vmatmul.mubr.bf16.gmra.mrb[0].mxu0 %v79
    %v585 = vpop.f32.mrb[0].mxu0
    %v586 = vadd.f32 0.0, %v585
    %v587 = vpop.f32.mrb[0].mxu0
    %v588 = vadd.f32 0.0, %v587
    %v589 = vpop.f32.mrb[0].mxu0
    %v590 = vadd.f32 0.0, %v589
    %v591 = vpop.f32.mrb[0].mxu0
    %v592 = vadd.f32 0.0, %v591
    %593 = vdwg.mxu0
    %v594 = vld [vmem:[%s6] sm:$0x1]
    %v595 = vlaneseq
    %v596 = vshrl.u32 %v595, 7
    %v597 = vsub.s32 0, %v596
    %v598 = vrot.slane %v594, %v597
    %v599 = vmul.f32 %v308, %v598
    %v600 = vmul.f32 %v312, %v598
    %v601 = vld [vmem:[%s6 + $0x2] sm:$0x1]
    %v602 = vlaneseq
    %v603 = vshrl.u32 %v602, 7
    %v604 = vsub.s32 0, %v603
    %v605 = vrot.slane %v601, %v604
    %v606 = vmul.f32 %v586, %v605
    %v607 = vmul.f32 %v590, %v605
    %v608 = vadd.f32 %v599, %v606
    %v609 = vadd.f32 %v600, %v607
    %610 = vadd.xlane.f32.xlu0 %v608
    %v611 = vpop.xlane.xlu0 %610
    %612 = vadd.xlane.f32.xlu0 %v609
    %v613 = vpop.xlane.xlu0 %612
    %v614 = vxor.u32 %v611, 2147483648
    %v615 = vxor.u32 %v613, 2147483648
    %v616 = vmul.f32 %v614, 1.442695
    %v617 = vpow.pop %v616
    %v618 = vmul.f32 %v615, 1.442695
    %v619 = vpow.pop %v618
    %v620 = vadd.f32 %v617, 1.0
    %v621 = vadd.f32 %v619, 1.0
    %v622 = vrcp.pop %v620
    %v623 = vmul.f32 1.0, %v622
    %v624 = vrcp.pop %v621
    %v625 = vmul.f32 1.0, %v624
    %v626 = vld [vmem:[%s6 + $0x1] sm:$0x1]
    %v627 = vlaneseq
    %v628 = vshrl.u32 %v627, 7
    %v629 = vsub.s32 0, %v628
    %v630 = vrot.slane %v626, %v629
    %v631 = vmul.f32 %v310, %v630
    %v632 = vmul.f32 %v314, %v630
    %v633 = vld [vmem:[%s6 + $0x3] sm:$0x1]
    %v634 = vlaneseq
    %v635 = vshrl.u32 %v634, 7
    %v636 = vsub.s32 0, %v635
    %v637 = vrot.slane %v633, %v636
    %v638 = vmul.f32 %v588, %v637
    %v639 = vmul.f32 %v592, %v637
    %v640 = vadd.f32 %v631, %v638
    %v641 = vadd.f32 %v632, %v639
    %642 = vadd.xlane.f32.xlu0 %v640
    %v643 = vpop.xlane.xlu0 %642
    %644 = vadd.xlane.f32.xlu0 %v641
    %v645 = vpop.xlane.xlu0 %644
    %v646 = vxor.u32 %v643, 2147483648
    %v647 = vxor.u32 %v645, 2147483648
    %v648 = vmul.f32 %v646, 1.442695
    %v649 = vpow.pop %v648
    %v650 = vmul.f32 %v647, 1.442695
    %v651 = vpow.pop %v650
    %v652 = vadd.f32 %v649, 1.0
    %v653 = vadd.f32 %v651, 1.0
    %v654 = vrcp.pop %v652
    %v655 = vmul.f32 1.0, %v654
    %v656 = vrcp.pop %v653
    %v657 = vmul.f32 1.0, %v656
    %v658 = vsub.f32 1.0, %v623
    %v659 = vsub.f32 1.0, %v625
    %v660 = vmul.f32 %v658, %v308
    %v661 = vmul.f32 %v659, %v312
    %v662 = vmul.f32 %v623, %v586
    %v663 = vmul.f32 %v625, %v590
    %v664 = vadd.f32 %v660, %v662
    %v665 = vadd.f32 %v661, %v663
    %v666 = vsub.f32 1.0, %v655
    %v667 = vsub.f32 1.0, %v657
    %v668 = vmul.f32 %v666, %v310
    %v669 = vmul.f32 %v667, %v314
    %v670 = vmul.f32 %v655, %v588
    %v671 = vmul.f32 %v657, %v592
    %v672 = vadd.f32 %v668, %v670
    %v673 = vadd.f32 %v669, %v671
    %v674 = vmul.f32 %v664, 0.125
    %v675 = vmul.f32 %v665, 0.125
    %v676 = vld [vmem:[%s6 + $0x9] sm:$0x1]
    %v677 = vlaneseq
    %v678 = vshrl.u32 %v677, 7
    %v679 = vsub.s32 0, %v678
    %v680 = vrot.slane %v676, %v679
    %v681 = vmul.f32 %v674, %v680
    %v682 = vmul.f32 %v675, %v680
    %v683 = vld [vmem:[%s6 + $0xa] sm:$0x1]
    %v684 = vlaneseq
    %v685 = vshrl.u32 %v684, 7
    %v686 = vsub.s32 0, %v685
    %v687 = vrot.slane %v683, %v686
    %v688 = vmul.f32 %v674, %v687
    %v689 = vmul.f32 %v675, %v687
    %v690 = vpack.c.bf16 %v682, %v681
    %v691 = vpack.c.bf16 %v689, %v688
    %v692 = vpack.c.bf16 %v673, %v672
    %693 = vmatprep.subr.bf16.mxu0 0
    %694 = vmatpush1.bf16.xpose.msra.mxu0 %v692
    %695 = vmatprep.subr.bf16.mxu0 0
    %696 = vmatpush1.bf16.xpose.msra.mxu0 0
    %697 = vmatprep.subr.bf16.mxu0 0
    %698 = vmatpush1.bf16.xpose.msra.mxu0 0
    %699 = vmatprep.subr.bf16.mxu0 0
    %700 = vmatpush1.bf16.xpose.msra.mxu0 0
    %701 = vmatprep.subr.bf16.mxu0 0
    %702 = vmatpush1.bf16.xpose.msra.mxu0 0
    %703 = vmatprep.subr.bf16.mxu0 0
    %704 = vmatpush1.bf16.xpose.msra.mxu0 0
    %705 = vmatprep.subr.bf16.mxu0 0
    %706 = vmatpush1.bf16.xpose.msra.mxu0 0
    %707 = vmatprep.subr.bf16.mxu0 0
    %708 = vmatpush1.bf16.xpose.msra.mxu0 0
    %709 = vmatprep.subr.bf16.mxu0 0
    %710 = vmatpush1.bf16.xpose.msra.mxu0 0
    %711 = vmatprep.subr.bf16.mxu0 0
    %712 = vmatpush1.bf16.xpose.msra.mxu0 0
    %713 = vmatprep.subr.bf16.mxu0 0
    %714 = vmatpush1.bf16.xpose.msra.mxu0 0
    %715 = vmatprep.subr.bf16.mxu0 0
    %716 = vmatpush1.bf16.xpose.msra.mxu0 0
    %717 = vmatprep.subr.bf16.mxu0 0
    %718 = vmatpush1.bf16.xpose.msra.mxu0 0
    %719 = vmatprep.subr.bf16.mxu0 0
    %720 = vmatpush1.bf16.xpose.msra.mxu0 0
    %721 = vmatprep.subr.bf16.mxu0 0
    %722 = vmatpush1.bf16.xpose.msra.mxu0 0
    %723 = vmatprep.subr.bf16.mxu0 0
    %724 = vmatpush1.bf16.xpose.msra.mxu0 0
    %725 = vmatprep.mubr.bf16.mxu0 0
    %726 = vmatmul.mubr.bf16.gmra.mrb[0].mxu0 %v690
    %v727 = vpop.f32.mrb[0].mxu0
    %v728 = vadd.f32 0.0, %v727
    %v729 = vpop.f32.mrb[0].mxu0
    %v730 = vpop.f32.mrb[0].mxu0
    %v731 = vadd.f32 0.0, %v730
    %v732 = vpop.f32.mrb[0].mxu0
    %733 = vmatprep.mubr.bf16.mxu0 0
    %734 = vmatmul.mubr.bf16.gmra.mrb[0].mxu0 %v691
    %v735 = vpop.f32.mrb[0].mxu0
    %v736 = vadd.f32 0.0, %v735
    %v737 = vpop.f32.mrb[0].mxu0
    %v738 = vpop.f32.mrb[0].mxu0
    %v739 = vadd.f32 0.0, %v738
    %v740 = vpop.f32.mrb[0].mxu0
    %741 = vdwg.mxu0
    %v742 = vld [vmem:[%s2] sm:$0xff]
    %v743 = vld [vmem:[%s2 + $0x8] sm:$0xff]
    %v744 = vld [vmem:[%s2 + $0x10] sm:$0xff]
    %v745 = vld [vmem:[%s2 + $0x18] sm:$0xff]
    %vm746 = vcmp.lt.f32.partialorder %v742, -0.5
    %vm747 = vcmp.lt.f32.partialorder %v743, -0.5
    %vm748 = vcmp.lt.f32.partialorder %v744, -0.5
    %vm749 = vcmp.lt.f32.partialorder %v745, -0.5
    %v750 = vsel %vm746, %v742, %v728
    %v751 = vsel %vm747, %v743, %v731
    %v752 = vsel %vm748, %v744, %v736
    %v753 = vsel %vm749, %v745, %v739
    %vm754 = vcmask 130048
    %v755 = vsel %vm754, %v750, -inf
    %756 = vmax.xlane.f32.xlu0 %v755
    %v757 = vpop.xlane.xlu0 %756
    %v758 = vsel %vm754, %v751, -inf
    %759 = vmax.xlane.f32.xlu0 %v758
    %v760 = vpop.xlane.xlu0 %759
    %v761 = vsel %vm754, %v752, -inf
    %762 = vmax.xlane.f32.xlu0 %v761
    %v763 = vpop.xlane.xlu0 %762
    %v764 = vsel %vm754, %v753, -inf
    %765 = vmax.xlane.f32.xlu0 %v764
    %v766 = vpop.xlane.xlu0 %765
    %v767 = vsub.f32 %v750, %v757
    %v768 = vsub.f32 %v751, %v760
    %v769 = vsub.f32 %v752, %v763
    %v770 = vsub.f32 %v753, %v766
    %v771 = vmul.f32 %v767, 1.442695
    %v772 = vpow.pop %v771
    %v773 = vmul.f32 %v768, 1.442695
    %v774 = vpow.pop %v773
    %v775 = vmul.f32 %v769, 1.442695
    %v776 = vpow.pop %v775
    %v777 = vmul.f32 %v770, 1.442695
    %v778 = vpow.pop %v777
    %v779 = vsel %vm754, %v772, 0.0
    %780 = vadd.xlane.f32.xlu0 %v779
    %v781 = vpop.xlane.xlu0 %780
    %v782 = vsel %vm754, %v774, 0.0
    %783 = vadd.xlane.f32.xlu0 %v782
    %v784 = vpop.xlane.xlu0 %783
    %v785 = vsel %vm754, %v776, 0.0
    %786 = vadd.xlane.f32.xlu0 %v785
    %v787 = vpop.xlane.xlu0 %786
    %v788 = vsel %vm754, %v778, 0.0
    %789 = vadd.xlane.f32.xlu0 %v788
    %v790 = vpop.xlane.xlu0 %789
    %v791 = vrcp.pop %v781
    %v792 = vrcp.pop %v784
    %v793 = vrcp.pop %v787
    %v794 = vrcp.pop %v790
    %v795 = vmul.f32 %v772, %v791
    %v796 = vmul.f32 %v774, %v792
    %v797 = vmul.f32 %v776, %v793
    %v798 = vmul.f32 %v778, %v794
    %v799 = vpack.c.bf16 %v796, %v795
    %v800 = vpack.c.bf16 %v798, %v797
    %v801 = vpack.c.bf16 %v355, %v351
    %v802 = vpack.c.bf16 %v357, %v353
    %v804 = vsel %vm754, %v800, 0
    %806 = vmatprep.subr.bf16.mxu0 0
    %807 = vmatpush1.bf16.msra.mxu0 %v802
    %808 = vmatprep.subr.bf16.mxu0 0
    %809 = vmatpush1.bf16.msra.mxu0 0
    %810 = vmatprep.subr.bf16.mxu0 0
    %811 = vmatpush1.bf16.msra.mxu0 0
    %812 = vmatprep.subr.bf16.mxu0 0
    %813 = vmatpush1.bf16.msra.mxu0 0
    %814 = vmatprep.subr.bf16.mxu0 0
    %815 = vmatpush1.bf16.msra.mxu0 0
    %816 = vmatprep.subr.bf16.mxu0 0
    %817 = vmatpush1.bf16.msra.mxu0 0
    %818 = vmatprep.subr.bf16.mxu0 0
    %819 = vmatpush1.bf16.msra.mxu0 0
    %820 = vmatprep.subr.bf16.mxu0 0
    %821 = vmatpush1.bf16.msra.mxu0 0
    %822 = vmatprep.subr.bf16.mxu0 0
    %823 = vmatpush1.bf16.msra.mxu0 0
    %824 = vmatprep.subr.bf16.mxu0 0
    %825 = vmatpush1.bf16.msra.mxu0 0
    %826 = vmatprep.subr.bf16.mxu0 0
    %827 = vmatpush1.bf16.msra.mxu0 0
    %828 = vmatprep.subr.bf16.mxu0 0
    %829 = vmatpush1.bf16.msra.mxu0 0
    %830 = vmatprep.subr.bf16.mxu0 0
    %831 = vmatpush1.bf16.msra.mxu0 0
    %832 = vmatprep.subr.bf16.mxu0 0
    %833 = vmatpush1.bf16.msra.mxu0 0
    %834 = vmatprep.subr.bf16.mxu0 0
    %835 = vmatpush1.bf16.msra.mxu0 0
    %836 = vmatprep.subr.bf16.mxu0 0
    %837 = vmatpush1.bf16.msra.mxu0 0
    %838 = vmatprep.mubr.bf16.mxu0 0
    %839 = vmatmul.mubr.bf16.gmra.mrb[0].mxu0 %v804
    %v840 = vpop.f32.mrb[0].mxu0
    %v841 = vadd.f32 0.0, %v840
    %v842 = vpop.f32.mrb[0].mxu0
    %v843 = vpop.f32.mrb[0].mxu0
    %v844 = vadd.f32 0.0, %v843
    %v845 = vpop.f32.mrb[0].mxu0
    %846 = vdwg.mxu0
    %v848 = vsel %vm754, %v799, 0
    %850 = vmatprep.subr.bf16.mxu0 0
    %851 = vmatpush1.bf16.msra.mxu0 %v801
    %852 = vmatprep.subr.bf16.mxu0 0
    %853 = vmatpush1.bf16.msra.mxu0 0
    %854 = vmatprep.subr.bf16.mxu0 0
    %855 = vmatpush1.bf16.msra.mxu0 0
    %856 = vmatprep.subr.bf16.mxu0 0
    %857 = vmatpush1.bf16.msra.mxu0 0
    %858 = vmatprep.subr.bf16.mxu0 0
    %859 = vmatpush1.bf16.msra.mxu0 0
    %860 = vmatprep.subr.bf16.mxu0 0
    %861 = vmatpush1.bf16.msra.mxu0 0
    %862 = vmatprep.subr.bf16.mxu0 0
    %863 = vmatpush1.bf16.msra.mxu0 0
    %864 = vmatprep.subr.bf16.mxu0 0
    %865 = vmatpush1.bf16.msra.mxu0 0
    %866 = vmatprep.subr.bf16.mxu0 0
    %867 = vmatpush1.bf16.msra.mxu0 0
    %868 = vmatprep.subr.bf16.mxu0 0
    %869 = vmatpush1.bf16.msra.mxu0 0
    %870 = vmatprep.subr.bf16.mxu0 0
    %871 = vmatpush1.bf16.msra.mxu0 0
    %872 = vmatprep.subr.bf16.mxu0 0
    %873 = vmatpush1.bf16.msra.mxu0 0
    %874 = vmatprep.subr.bf16.mxu0 0
    %875 = vmatpush1.bf16.msra.mxu0 0
    %876 = vmatprep.subr.bf16.mxu0 0
    %877 = vmatpush1.bf16.msra.mxu0 0
    %878 = vmatprep.subr.bf16.mxu0 0
    %879 = vmatpush1.bf16.msra.mxu0 0
    %880 = vmatprep.subr.bf16.mxu0 0
    %881 = vmatpush1.bf16.msra.mxu0 0
    %882 = vmatprep.mubr.bf16.mxu0 0
    %883 = vmatmul.mubr.bf16.gmra.mrb[0].mxu0 %v848
    %v884 = vpop.f32.mrb[0].mxu0
    %v885 = vadd.f32 %v841, %v884
    %v886 = vpop.f32.mrb[0].mxu0
    %v887 = vpop.f32.mrb[0].mxu0
    %v888 = vadd.f32 %v844, %v887
    %v889 = vpop.f32.mrb[0].mxu0
    %890 = vdwg.mxu0
    %v891 = vadd.f32 %v72, %v885
    %v892 = vadd.f32 %v73, %v888
    %v893 = vld [vmem:[%s6 + $0x4] sm:$0x1]
    %v894 = vld [vmem:[%s6 + $0x5] sm:$0x1]
    %895 = vadd.xlane.f32.xlu0 %v891
    %v896 = vpop.xlane.xlu0 %895
    %897 = vadd.xlane.f32.xlu0 %v892
    %v898 = vpop.xlane.xlu0 %897
    %v899 = vrcp.pop 128.0
    %v900 = vmul.f32 %v896, %v899
    %v901 = vmul.f32 %v898, %v899
    %v902 = vsub.f32 %v891, %v900
    %v903 = vsub.f32 %v892, %v901
    %v904 = vmul.f32 %v902, %v902
    %v905 = vmul.f32 %v903, %v903
    %906 = vadd.xlane.f32.xlu0 %v904
    %v907 = vpop.xlane.xlu0 %906
    %908 = vadd.xlane.f32.xlu0 %v905
    %v909 = vpop.xlane.xlu0 %908
    %v910 = vmul.f32 %v907, 0.007874016
    %v911 = vmul.f32 %v909, 0.007874016
    %v912 = vlaneseq
    %v913 = vshrl.u32 %v912, 7
    %v914 = vsub.s32 0, %v913
    %v915 = vrot.slane %v893, %v914
    %v916 = vmul.f32 %v915, %v902
    %v917 = vmul.f32 %v915, %v903
    %v918 = vrsqrt.pop %v910
    %v919 = vmul.f32 %v910, %v918
    %vm920 = vcmp.eq.f32.partialorder %v910, inf
    %v921 = vsel %vm920, %v910, %v919
    %vm922 = vcmp.eq.f32.partialorder %v910, 0.0
    %v923 = vand.u32 %v910, 2147483648
    %v924 = vsel %vm922, %v923, %v921
    %v925 = vrsqrt.pop %v911
    %v926 = vmul.f32 %v911, %v925
    %vm927 = vcmp.eq.f32.partialorder %v911, inf
    %v928 = vsel %vm927, %v911, %v926
    %vm929 = vcmp.eq.f32.partialorder %v911, 0.0
    %v930 = vand.u32 %v911, 2147483648
    %v931 = vsel %vm929, %v930, %v928
    %v932 = vadd.f32 %v924, 1e-06
    %v933 = vadd.f32 %v931, 1e-06
    %v934 = vrcp.pop %v932
    %v935 = vmul.f32 %v916, %v934
    %v936 = vrcp.pop %v933
    %v937 = vmul.f32 %v917, %v936
    %v938 = vlaneseq
    %v939 = vshrl.u32 %v938, 7
    %v940 = vsub.s32 0, %v939
    %v941 = vrot.slane %v894, %v940
    %v942 = vadd.f32 %v935, %v941
    %v943 = vadd.f32 %v937, %v941
    %v944 = vpack.c.bf16 %v943, %v942
    %v945 = vld [vmem:[#allocation2 + $0x10] sm:$0xff]
    %v946 = vld [vmem:[#allocation2 + $0x18] sm:$0xff]
    %v947 = vld [vmem:[#allocation2 + $0x30] sm:$0xff]
    %v948 = vld [vmem:[#allocation2 + $0x38] sm:$0xff]
    %v949 = vld [vmem:[#allocation2 + $0x50] sm:$0xff]
    %v950 = vld [vmem:[#allocation2 + $0x58] sm:$0xff]
    %v951 = vld [vmem:[#allocation2 + $0x70] sm:$0xff]
    %v952 = vld [vmem:[#allocation2 + $0x78] sm:$0xff]
    %v953 = vld [vmem:[#allocation2 + $0x90] sm:$0xff]
    %v954 = vld [vmem:[#allocation2 + $0x98] sm:$0xff]
    %v955 = vld [vmem:[#allocation2 + $0xb0] sm:$0xff]
    %v956 = vld [vmem:[#allocation2 + $0xb8] sm:$0xff]
    %v957 = vld [vmem:[#allocation2 + $0xd0] sm:$0xff]
    %v958 = vld [vmem:[#allocation2 + $0xd8] sm:$0xff]
    %v959 = vld [vmem:[#allocation2 + $0xf0] sm:$0xff]
    %v960 = vld [vmem:[#allocation2 + $0xf8] sm:$0xff]
    %v961 = vld [vmem:[#allocation2 + $0x110] sm:$0xff]
    %v962 = vld [vmem:[#allocation2 + $0x118] sm:$0xff]
    %v963 = vld [vmem:[#allocation2 + $0x130] sm:$0xff]
    %v964 = vld [vmem:[#allocation2 + $0x138] sm:$0xff]
    %v965 = vld [vmem:[#allocation2 + $0x150] sm:$0xff]
    %v966 = vld [vmem:[#allocation2 + $0x158] sm:$0xff]
    %v967 = vld [vmem:[#allocation2 + $0x170] sm:$0xff]
    %v968 = vld [vmem:[#allocation2 + $0x178] sm:$0xff]
    %v969 = vld [vmem:[#allocation2 + $0x190] sm:$0xff]
    %v970 = vld [vmem:[#allocation2 + $0x198] sm:$0xff]
    %v971 = vld [vmem:[#allocation2 + $0x1b0] sm:$0xff]
    %v972 = vld [vmem:[#allocation2 + $0x1b8] sm:$0xff]
    %v973 = vld [vmem:[#allocation2 + $0x1d0] sm:$0xff]
    %v974 = vld [vmem:[#allocation2 + $0x1d8] sm:$0xff]
    %v975 = vld [vmem:[#allocation2 + $0x1f0] sm:$0xff]
    %v976 = vld [vmem:[#allocation2 + $0x1f8] sm:$0xff]
    %v977 = vld [vmem:[%s7] sm:$0xf]
    %v979 = vlaneseq
    %v980 = vshrl.u32 %v979, 7
    %v981 = vsub.s32 0, %v980
    %v982 = vrot.slane %v977, %v981
    %v983 = vlaneseq
    %v984 = vshrl.u32 %v983, 7
    %v985 = vsub.s32 1, %v984
    %v986 = vrot.slane %v977, %v985
    %v987 = vlaneseq
    %v988 = vshrl.u32 %v987, 7
    %v989 = vsub.s32 2, %v988
    %v990 = vrot.slane %v977, %v989
    %v991 = vlaneseq
    %v992 = vshrl.u32 %v991, 7
    %v993 = vsub.s32 3, %v992
    %v994 = vrot.slane %v977, %v993
    %v1031 = vunpack.c.l.b16 %v945
    %v1032 = vunpack.c.h.b16 %v945
    %v1033 = vunpack.c.l.b16 %v946
    %v1034 = vunpack.c.h.b16 %v946
    %v1035 = vunpack.c.l.b16 %v947
    %v1036 = vunpack.c.h.b16 %v947
    %v1037 = vunpack.c.l.b16 %v948
    %v1038 = vunpack.c.h.b16 %v948
    %v1039 = vunpack.c.l.b16 %v949
    %v1040 = vunpack.c.h.b16 %v949
    %v1041 = vunpack.c.l.b16 %v950
    %v1042 = vunpack.c.h.b16 %v950
    %v1043 = vunpack.c.l.b16 %v951
    %v1044 = vunpack.c.h.b16 %v951
    %v1045 = vunpack.c.l.b16 %v952
    %v1046 = vunpack.c.h.b16 %v952
    %v1047 = vunpack.c.l.b16 %v953
    %v1048 = vunpack.c.h.b16 %v953
    %v1049 = vunpack.c.l.b16 %v954
    %v1050 = vunpack.c.h.b16 %v954
    %v1051 = vunpack.c.l.b16 %v955
    %v1052 = vunpack.c.h.b16 %v955
    %v1053 = vunpack.c.l.b16 %v956
    %v1054 = vunpack.c.h.b16 %v956
    %v1055 = vunpack.c.l.b16 %v957
    %v1056 = vunpack.c.h.b16 %v957
    %v1057 = vunpack.c.l.b16 %v958
    %v1058 = vunpack.c.h.b16 %v958
    %v1059 = vunpack.c.l.b16 %v959
    %v1060 = vunpack.c.h.b16 %v959
    %v1061 = vunpack.c.l.b16 %v960
    %v1062 = vunpack.c.h.b16 %v960
    %v1063 = vunpack.c.l.b16 %v961
    %v1064 = vunpack.c.h.b16 %v961
    %v1065 = vunpack.c.l.b16 %v962
    %v1066 = vunpack.c.h.b16 %v962
    %v1067 = vunpack.c.l.b16 %v963
    %v1068 = vunpack.c.h.b16 %v963
    %v1069 = vunpack.c.l.b16 %v964
    %v1070 = vunpack.c.h.b16 %v964
    %v1071 = vunpack.c.l.b16 %v965
    %v1072 = vunpack.c.h.b16 %v965
    %v1073 = vunpack.c.l.b16 %v966
    %v1074 = vunpack.c.h.b16 %v966
    %v1075 = vunpack.c.l.b16 %v967
    %v1076 = vunpack.c.h.b16 %v967
    %v1077 = vunpack.c.l.b16 %v968
    %v1078 = vunpack.c.h.b16 %v968
    %v1079 = vunpack.c.l.b16 %v969
    %v1080 = vunpack.c.h.b16 %v969
    %v1081 = vunpack.c.l.b16 %v970
    %v1082 = vunpack.c.h.b16 %v970
    %v1083 = vunpack.c.l.b16 %v971
    %v1084 = vunpack.c.h.b16 %v971
    %v1085 = vunpack.c.l.b16 %v972
    %v1086 = vunpack.c.h.b16 %v972
    %v1087 = vunpack.c.l.b16 %v973
    %v1088 = vunpack.c.h.b16 %v973
    %v1089 = vunpack.c.l.b16 %v974
    %v1090 = vunpack.c.h.b16 %v974
    %v1091 = vunpack.c.l.b16 %v975
    %v1092 = vunpack.c.h.b16 %v975
    %v1093 = vunpack.c.l.b16 %v976
    %v1094 = vunpack.c.h.b16 %v976
    %v1095 = vpack.c.b16 %v1035, %v1031
    %v1096 = vpack.c.b16 %v1036, %v1032
    %v1097 = vpack.c.b16 %v1037, %v1033
    %v1098 = vpack.c.b16 %v1038, %v1034
    %v1099 = vpack.c.b16 %v1043, %v1039
    %v1100 = vpack.c.b16 %v1044, %v1040
    %v1101 = vpack.c.b16 %v1045, %v1041
    %v1102 = vpack.c.b16 %v1046, %v1042
    %v1103 = vpack.c.b16 %v1051, %v1047
    %v1104 = vpack.c.b16 %v1052, %v1048
    %v1105 = vpack.c.b16 %v1053, %v1049
    %v1106 = vpack.c.b16 %v1054, %v1050
    %v1107 = vpack.c.b16 %v1059, %v1055
    %v1108 = vpack.c.b16 %v1060, %v1056
    %v1109 = vpack.c.b16 %v1061, %v1057
    %v1110 = vpack.c.b16 %v1062, %v1058
    %v1111 = vpack.c.b16 %v1067, %v1063
    %v1112 = vpack.c.b16 %v1068, %v1064
    %v1113 = vpack.c.b16 %v1069, %v1065
    %v1114 = vpack.c.b16 %v1070, %v1066
    %v1115 = vpack.c.b16 %v1075, %v1071
    %v1116 = vpack.c.b16 %v1076, %v1072
    %v1117 = vpack.c.b16 %v1077, %v1073
    %v1118 = vpack.c.b16 %v1078, %v1074
    %v1119 = vpack.c.b16 %v1083, %v1079
    %v1120 = vpack.c.b16 %v1084, %v1080
    %v1121 = vpack.c.b16 %v1085, %v1081
    %v1122 = vpack.c.b16 %v1086, %v1082
    %v1123 = vpack.c.b16 %v1091, %v1087
    %v1124 = vpack.c.b16 %v1092, %v1088
    %v1125 = vpack.c.b16 %v1093, %v1089
    %v1126 = vpack.c.b16 %v1094, %v1090
    %1159 = vmatprep.subr.bf16.mxu0 %v1096
    %1160 = vmatpush1.bf16.msra.mxu0 %v1095
    %1161 = vmatprep.subr.bf16.mxu0 %v1100
    %1162 = vmatpush1.bf16.msra.mxu0 %v1099
    %1163 = vmatprep.subr.bf16.mxu0 %v1104
    %1164 = vmatpush1.bf16.msra.mxu0 %v1103
    %1165 = vmatprep.subr.bf16.mxu0 %v1108
    %1166 = vmatpush1.bf16.msra.mxu0 %v1107
    %1167 = vmatprep.subr.bf16.mxu0 %v1112
    %1168 = vmatpush1.bf16.msra.mxu0 %v1111
    %1169 = vmatprep.subr.bf16.mxu0 %v1116
    %1170 = vmatpush1.bf16.msra.mxu0 %v1115
    %1171 = vmatprep.subr.bf16.mxu0 %v1120
    %1172 = vmatpush1.bf16.msra.mxu0 %v1119
    %1173 = vmatprep.subr.bf16.mxu0 %v1124
    %1174 = vmatpush1.bf16.msra.mxu0 %v1123
    %1175 = vmatprep.subr.bf16.mxu0 0
    %1176 = vmatpush1.bf16.msra.mxu0 0
    %1177 = vmatprep.subr.bf16.mxu0 0
    %1178 = vmatpush1.bf16.msra.mxu0 0
    %1179 = vmatprep.subr.bf16.mxu0 0
    %1180 = vmatpush1.bf16.msra.mxu0 0
    %1181 = vmatprep.subr.bf16.mxu0 0
    %1182 = vmatpush1.bf16.msra.mxu0 0
    %1183 = vmatprep.subr.bf16.mxu0 0
    %1184 = vmatpush1.bf16.msra.mxu0 0
    %1185 = vmatprep.subr.bf16.mxu0 0
    %1186 = vmatpush1.bf16.msra.mxu0 0
    %1187 = vmatprep.subr.bf16.mxu0 0
    %1188 = vmatpush1.bf16.msra.mxu0 0
    %1189 = vmatprep.subr.bf16.mxu0 0
    %1190 = vmatpush1.bf16.msra.mxu0 0
    %1191 = vmatprep.mubr.bf16.mxu0 0
    %1192 = vmatmul.mubr.bf16.gmra.mrb[0].mxu0 %v944
    %v1193 = vpop.f32.mrb[0].mxu0
    %v1194 = vadd.f32 %v982, %v1193
    %v1195 = vpop.f32.mrb[0].mxu0
    %v1196 = vadd.f32 %v986, %v1195
    %v1197 = vpop.f32.mrb[0].mxu0
    %v1198 = vadd.f32 %v982, %v1197
    %v1199 = vpop.f32.mrb[0].mxu0
    %v1200 = vadd.f32 %v986, %v1199
    %1201 = vdwg.mxu0
    %1202 = vmatprep.subr.bf16.mxu0 %v1098
    %1203 = vmatpush1.bf16.msra.mxu0 %v1097
    %1204 = vmatprep.subr.bf16.mxu0 %v1102
    %1205 = vmatpush1.bf16.msra.mxu0 %v1101
    %1206 = vmatprep.subr.bf16.mxu0 %v1106
    %1207 = vmatpush1.bf16.msra.mxu0 %v1105
    %1208 = vmatprep.subr.bf16.mxu0 %v1110
    %1209 = vmatpush1.bf16.msra.mxu0 %v1109
    %1210 = vmatprep.subr.bf16.mxu0 %v1114
    %1211 = vmatpush1.bf16.msra.mxu0 %v1113
    %1212 = vmatprep.subr.bf16.mxu0 %v1118
    %1213 = vmatpush1.bf16.msra.mxu0 %v1117
    %1214 = vmatprep.subr.bf16.mxu0 %v1122
    %1215 = vmatpush1.bf16.msra.mxu0 %v1121
    %1216 = vmatprep.subr.bf16.mxu0 %v1126
    %1217 = vmatpush1.bf16.msra.mxu0 %v1125
    %1218 = vmatprep.subr.bf16.mxu0 0
    %1219 = vmatpush1.bf16.msra.mxu0 0
    %1220 = vmatprep.subr.bf16.mxu0 0
    %1221 = vmatpush1.bf16.msra.mxu0 0
    %1222 = vmatprep.subr.bf16.mxu0 0
    %1223 = vmatpush1.bf16.msra.mxu0 0
    %1224 = vmatprep.subr.bf16.mxu0 0
    %1225 = vmatpush1.bf16.msra.mxu0 0
    %1226 = vmatprep.subr.bf16.mxu0 0
    %1227 = vmatpush1.bf16.msra.mxu0 0
    %1228 = vmatprep.subr.bf16.mxu0 0
    %1229 = vmatpush1.bf16.msra.mxu0 0
    %1230 = vmatprep.subr.bf16.mxu0 0
    %1231 = vmatpush1.bf16.msra.mxu0 0
    %1232 = vmatprep.subr.bf16.mxu0 0
    %1233 = vmatpush1.bf16.msra.mxu0 0
    %1234 = vmatprep.mubr.bf16.mxu0 0
    %1235 = vmatmul.mubr.bf16.gmra.mrb[0].mxu0 %v944
    %v1236 = vpop.f32.mrb[0].mxu0
    %v1237 = vadd.f32 %v990, %v1236
    %v1238 = vpop.f32.mrb[0].mxu0
    %v1239 = vadd.f32 %v994, %v1238
    %v1240 = vpop.f32.mrb[0].mxu0
    %v1241 = vadd.f32 %v990, %v1240
    %v1242 = vpop.f32.mrb[0].mxu0
    %v1243 = vadd.f32 %v994, %v1242
    %1244 = vdwg.mxu0
    %v1245 = vmax.f32 %v1194, 0.0
    %v1246 = vmax.f32 %v1196, 0.0
    %v1247 = vmax.f32 %v1237, 0.0
    %v1248 = vmax.f32 %v1239, 0.0
    %v1249 = vmax.f32 %v1198, 0.0
    %v1250 = vmax.f32 %v1200, 0.0
    %v1251 = vmax.f32 %v1241, 0.0
    %v1252 = vmax.f32 %v1243, 0.0
    %v1253 = vpack.c.bf16 %v1249, %v1245
    %v1254 = vpack.c.bf16 %v1250, %v1246
    %v1255 = vpack.c.bf16 %v1251, %v1247
    %v1256 = vpack.c.bf16 %v1252, %v1248
    %v1257 = vld [vmem:[#allocation7] sm:$0xf]
    %v1258 = vld [vmem:[#allocation7 + $0x4] sm:$0xf]
    %v1259 = vld [vmem:[#allocation7 + $0x8] sm:$0xf]
    %v1260 = vld [vmem:[#allocation7 + $0xc] sm:$0xf]
    %v1261 = vld [vmem:[#allocation7 + $0x10] sm:$0xf]
    %v1262 = vld [vmem:[#allocation7 + $0x14] sm:$0xf]
    %v1263 = vld [vmem:[#allocation7 + $0x18] sm:$0xf]
    %v1264 = vld [vmem:[#allocation7 + $0x1c] sm:$0xf]
    %v1265 = vld [vmem:[#allocation7 + $0x20] sm:$0xf]
    %v1266 = vld [vmem:[#allocation7 + $0x24] sm:$0xf]
    %v1267 = vld [vmem:[#allocation7 + $0x28] sm:$0xf]
    %v1268 = vld [vmem:[#allocation7 + $0x2c] sm:$0xf]
    %v1269 = vld [vmem:[#allocation7 + $0x30] sm:$0xf]
    %v1270 = vld [vmem:[#allocation7 + $0x34] sm:$0xf]
    %v1271 = vld [vmem:[#allocation7 + $0x38] sm:$0xf]
    %v1272 = vld [vmem:[#allocation7 + $0x3c] sm:$0xf]
    %v1273 = vld [vmem:[#allocation7 + $0x40] sm:$0xf]
    %v1274 = vld [vmem:[#allocation7 + $0x44] sm:$0xf]
    %v1275 = vld [vmem:[#allocation7 + $0x48] sm:$0xf]
    %v1276 = vld [vmem:[#allocation7 + $0x4c] sm:$0xf]
    %v1277 = vld [vmem:[#allocation7 + $0x50] sm:$0xf]
    %v1278 = vld [vmem:[#allocation7 + $0x54] sm:$0xf]
    %v1279 = vld [vmem:[#allocation7 + $0x58] sm:$0xf]
    %v1280 = vld [vmem:[#allocation7 + $0x5c] sm:$0xf]
    %v1281 = vld [vmem:[#allocation7 + $0x60] sm:$0xf]
    %v1282 = vld [vmem:[#allocation7 + $0x64] sm:$0xf]
    %v1283 = vld [vmem:[#allocation7 + $0x68] sm:$0xf]
    %v1284 = vld [vmem:[#allocation7 + $0x6c] sm:$0xf]
    %v1285 = vld [vmem:[#allocation7 + $0x70] sm:$0xf]
    %v1286 = vld [vmem:[#allocation7 + $0x74] sm:$0xf]
    %v1287 = vld [vmem:[#allocation7 + $0x78] sm:$0xf]
    %v1288 = vld [vmem:[#allocation7 + $0x7c] sm:$0xf]
    %v1289 = vld [vmem:[#allocation7 + $0x80] sm:$0xf]
    %v1290 = vld [vmem:[#allocation7 + $0x84] sm:$0xf]
    %v1291 = vld [vmem:[#allocation7 + $0x88] sm:$0xf]
    %v1292 = vld [vmem:[#allocation7 + $0x8c] sm:$0xf]
    %v1293 = vld [vmem:[#allocation7 + $0x90] sm:$0xf]
    %v1294 = vld [vmem:[#allocation7 + $0x94] sm:$0xf]
    %v1295 = vld [vmem:[#allocation7 + $0x98] sm:$0xf]
    %v1296 = vld [vmem:[#allocation7 + $0x9c] sm:$0xf]
    %v1297 = vld [vmem:[#allocation7 + $0xa0] sm:$0xf]
    %v1298 = vld [vmem:[#allocation7 + $0xa4] sm:$0xf]
    %v1299 = vld [vmem:[#allocation7 + $0xa8] sm:$0xf]
    %v1300 = vld [vmem:[#allocation7 + $0xac] sm:$0xf]
    %v1301 = vld [vmem:[#allocation7 + $0xb0] sm:$0xf]
    %v1302 = vld [vmem:[#allocation7 + $0xb4] sm:$0xf]
    %v1303 = vld [vmem:[#allocation7 + $0xb8] sm:$0xf]
    %v1304 = vld [vmem:[#allocation7 + $0xbc] sm:$0xf]
    %v1305 = vld [vmem:[#allocation7 + $0xc0] sm:$0xf]
    %v1306 = vld [vmem:[#allocation7 + $0xc4] sm:$0xf]
    %v1307 = vld [vmem:[#allocation7 + $0xc8] sm:$0xf]
    %v1308 = vld [vmem:[#allocation7 + $0xcc] sm:$0xf]
    %v1309 = vld [vmem:[#allocation7 + $0xd0] sm:$0xf]
    %v1310 = vld [vmem:[#allocation7 + $0xd4] sm:$0xf]
    %v1311 = vld [vmem:[#allocation7 + $0xd8] sm:$0xf]
    %v1312 = vld [vmem:[#allocation7 + $0xdc] sm:$0xf]
    %v1313 = vld [vmem:[#allocation7 + $0xe0] sm:$0xf]
    %v1314 = vld [vmem:[#allocation7 + $0xe4] sm:$0xf]
    %v1315 = vld [vmem:[#allocation7 + $0xe8] sm:$0xf]
    %v1316 = vld [vmem:[#allocation7 + $0xec] sm:$0xf]
    %v1317 = vld [vmem:[#allocation7 + $0xf0] sm:$0xf]
    %v1318 = vld [vmem:[#allocation7 + $0xf4] sm:$0xf]
    %v1319 = vld [vmem:[#allocation7 + $0xf8] sm:$0xf]
    %v1320 = vld [vmem:[#allocation7 + $0xfc] sm:$0xf]
    %v1321 = vld [vmem:[%s6 + $0x8] sm:$0x1]
    %v1322 = vlaneseq
    %v1323 = vshrl.u32 %v1322, 7
    %v1324 = vsub.s32 0, %v1323
    %v1325 = vrot.slane %v1321, %v1324
    %v1390 = vunpack.c.l.b16 %v1257
    %v1391 = vunpack.c.l.b16 %v1258
    %v1392 = vunpack.c.l.b16 %v1259
    %v1393 = vunpack.c.l.b16 %v1260
    %v1394 = vunpack.c.l.b16 %v1261
    %v1395 = vunpack.c.l.b16 %v1262
    %v1396 = vunpack.c.l.b16 %v1263
    %v1397 = vunpack.c.l.b16 %v1264
    %v1398 = vunpack.c.l.b16 %v1265
    %v1399 = vunpack.c.l.b16 %v1266
    %v1400 = vunpack.c.l.b16 %v1267
    %v1401 = vunpack.c.l.b16 %v1268
    %v1402 = vunpack.c.l.b16 %v1269
    %v1403 = vunpack.c.l.b16 %v1270
    %v1404 = vunpack.c.l.b16 %v1271
    %v1405 = vunpack.c.l.b16 %v1272
    %v1406 = vunpack.c.l.b16 %v1273
    %v1407 = vunpack.c.l.b16 %v1274
    %v1408 = vunpack.c.l.b16 %v1275
    %v1409 = vunpack.c.l.b16 %v1276
    %v1410 = vunpack.c.l.b16 %v1277
    %v1411 = vunpack.c.l.b16 %v1278
    %v1412 = vunpack.c.l.b16 %v1279
    %v1413 = vunpack.c.l.b16 %v1280
    %v1414 = vunpack.c.l.b16 %v1281
    %v1415 = vunpack.c.l.b16 %v1282
    %v1416 = vunpack.c.l.b16 %v1283
    %v1417 = vunpack.c.l.b16 %v1284
    %v1418 = vunpack.c.l.b16 %v1285
    %v1419 = vunpack.c.l.b16 %v1286
    %v1420 = vunpack.c.l.b16 %v1287
    %v1421 = vunpack.c.l.b16 %v1288
    %v1422 = vunpack.c.l.b16 %v1289
    %v1423 = vunpack.c.l.b16 %v1290
    %v1424 = vunpack.c.l.b16 %v1291
    %v1425 = vunpack.c.l.b16 %v1292
    %v1426 = vunpack.c.l.b16 %v1293
    %v1427 = vunpack.c.l.b16 %v1294
    %v1428 = vunpack.c.l.b16 %v1295
    %v1429 = vunpack.c.l.b16 %v1296
    %v1430 = vunpack.c.l.b16 %v1297
    %v1431 = vunpack.c.l.b16 %v1298
    %v1432 = vunpack.c.l.b16 %v1299
    %v1433 = vunpack.c.l.b16 %v1300
    %v1434 = vunpack.c.l.b16 %v1301
    %v1435 = vunpack.c.l.b16 %v1302
    %v1436 = vunpack.c.l.b16 %v1303
    %v1437 = vunpack.c.l.b16 %v1304
    %v1438 = vunpack.c.l.b16 %v1305
    %v1439 = vunpack.c.l.b16 %v1306
    %v1440 = vunpack.c.l.b16 %v1307
    %v1441 = vunpack.c.l.b16 %v1308
    %v1442 = vunpack.c.l.b16 %v1309
    %v1443 = vunpack.c.l.b16 %v1310
    %v1444 = vunpack.c.l.b16 %v1311
    %v1445 = vunpack.c.l.b16 %v1312
    %v1446 = vunpack.c.l.b16 %v1313
    %v1447 = vunpack.c.l.b16 %v1314
    %v1448 = vunpack.c.l.b16 %v1315
    %v1449 = vunpack.c.l.b16 %v1316
    %v1450 = vunpack.c.l.b16 %v1317
    %v1451 = vunpack.c.l.b16 %v1318
    %v1452 = vunpack.c.l.b16 %v1319
    %v1453 = vunpack.c.l.b16 %v1320
    %v1454 = vpack.c.b16 %v1391, %v1390
    %v1455 = vpack.c.b16 %v1393, %v1392
    %v1456 = vpack.c.b16 %v1395, %v1394
    %v1457 = vpack.c.b16 %v1397, %v1396
    %v1458 = vpack.c.b16 %v1399, %v1398
    %v1459 = vpack.c.b16 %v1401, %v1400
    %v1460 = vpack.c.b16 %v1403, %v1402
    %v1461 = vpack.c.b16 %v1405, %v1404
    %v1462 = vpack.c.b16 %v1407, %v1406
    %v1463 = vpack.c.b16 %v1409, %v1408
    %v1464 = vpack.c.b16 %v1411, %v1410
    %v1465 = vpack.c.b16 %v1413, %v1412
    %v1466 = vpack.c.b16 %v1415, %v1414
    %v1467 = vpack.c.b16 %v1417, %v1416
    %v1468 = vpack.c.b16 %v1419, %v1418
    %v1469 = vpack.c.b16 %v1421, %v1420
    %v1470 = vpack.c.b16 %v1423, %v1422
    %v1471 = vpack.c.b16 %v1425, %v1424
    %v1472 = vpack.c.b16 %v1427, %v1426
    %v1473 = vpack.c.b16 %v1429, %v1428
    %v1474 = vpack.c.b16 %v1431, %v1430
    %v1475 = vpack.c.b16 %v1433, %v1432
    %v1476 = vpack.c.b16 %v1435, %v1434
    %v1477 = vpack.c.b16 %v1437, %v1436
    %v1478 = vpack.c.b16 %v1439, %v1438
    %v1479 = vpack.c.b16 %v1441, %v1440
    %v1480 = vpack.c.b16 %v1443, %v1442
    %v1481 = vpack.c.b16 %v1445, %v1444
    %v1482 = vpack.c.b16 %v1447, %v1446
    %v1483 = vpack.c.b16 %v1449, %v1448
    %v1484 = vpack.c.b16 %v1451, %v1450
    %v1485 = vpack.c.b16 %v1453, %v1452
    %1518 = vmatprep.subr.bf16.mxu0 0
    %1519 = vmatpush1.bf16.msra.mxu0 %v1454
    %1520 = vmatprep.subr.bf16.mxu0 0
    %1521 = vmatpush1.bf16.msra.mxu0 %v1455
    %1522 = vmatprep.subr.bf16.mxu0 0
    %1523 = vmatpush1.bf16.msra.mxu0 %v1456
    %1524 = vmatprep.subr.bf16.mxu0 0
    %1525 = vmatpush1.bf16.msra.mxu0 %v1457
    %1526 = vmatprep.subr.bf16.mxu0 0
    %1527 = vmatpush1.bf16.msra.mxu0 %v1458
    %1528 = vmatprep.subr.bf16.mxu0 0
    %1529 = vmatpush1.bf16.msra.mxu0 %v1459
    %1530 = vmatprep.subr.bf16.mxu0 0
    %1531 = vmatpush1.bf16.msra.mxu0 %v1460
    %1532 = vmatprep.subr.bf16.mxu0 0
    %1533 = vmatpush1.bf16.msra.mxu0 %v1461
    %1534 = vmatprep.subr.bf16.mxu0 0
    %1535 = vmatpush1.bf16.msra.mxu0 %v1462
    %1536 = vmatprep.subr.bf16.mxu0 0
    %1537 = vmatpush1.bf16.msra.mxu0 %v1463
    %1538 = vmatprep.subr.bf16.mxu0 0
    %1539 = vmatpush1.bf16.msra.mxu0 %v1464
    %1540 = vmatprep.subr.bf16.mxu0 0
    %1541 = vmatpush1.bf16.msra.mxu0 %v1465
    %1542 = vmatprep.subr.bf16.mxu0 0
    %1543 = vmatpush1.bf16.msra.mxu0 %v1466
    %1544 = vmatprep.subr.bf16.mxu0 0
    %1545 = vmatpush1.bf16.msra.mxu0 %v1467
    %1546 = vmatprep.subr.bf16.mxu0 0
    %1547 = vmatpush1.bf16.msra.mxu0 %v1468
    %1548 = vmatprep.subr.bf16.mxu0 0
    %1549 = vmatpush1.bf16.msra.mxu0 %v1469
    %1550 = vmatprep.mubr.bf16.mxu0 %v1254
    %1551 = vmatmul.mubr.bf16.gmra.mrb[0].mxu0 %v1253
    %v1552 = vpop.f32.mrb[0].mxu0
    %v1553 = vadd.f32 %v1325, %v1552
    %v1554 = vpop.f32.mrb[0].mxu0
    %v1555 = vpop.f32.mrb[0].mxu0
    %v1556 = vadd.f32 %v1325, %v1555
    %v1557 = vpop.f32.mrb[0].mxu0
    %1558 = vdwg.mxu0
    %1559 = vmatprep.subr.bf16.mxu0 0
    %1560 = vmatpush1.bf16.msra.mxu0 %v1470
    %1561 = vmatprep.subr.bf16.mxu0 0
    %1562 = vmatpush1.bf16.msra.mxu0 %v1471
    %1563 = vmatprep.subr.bf16.mxu0 0
    %1564 = vmatpush1.bf16.msra.mxu0 %v1472
    %1565 = vmatprep.subr.bf16.mxu0 0
    %1566 = vmatpush1.bf16.msra.mxu0 %v1473
    %1567 = vmatprep.subr.bf16.mxu0 0
    %1568 = vmatpush1.bf16.msra.mxu0 %v1474
    %1569 = vmatprep.subr.bf16.mxu0 0
    %1570 = vmatpush1.bf16.msra.mxu0 %v1475
    %1571 = vmatprep.subr.bf16.mxu0 0
    %1572 = vmatpush1.bf16.msra.mxu0 %v1476
    %1573 = vmatprep.subr.bf16.mxu0 0
    %1574 = vmatpush1.bf16.msra.mxu0 %v1477
    %1575 = vmatprep.subr.bf16.mxu0 0
    %1576 = vmatpush1.bf16.msra.mxu0 %v1478
    %1577 = vmatprep.subr.bf16.mxu0 0
    %1578 = vmatpush1.bf16.msra.mxu0 %v1479
    %1579 = vmatprep.subr.bf16.mxu0 0
    %1580 = vmatpush1.bf16.msra.mxu0 %v1480
    %1581 = vmatprep.subr.bf16.mxu0 0
    %1582 = vmatpush1.bf16.msra.mxu0 %v1481
    %1583 = vmatprep.subr.bf16.mxu0 0
    %1584 = vmatpush1.bf16.msra.mxu0 %v1482
    %1585 = vmatprep.subr.bf16.mxu0 0
    %1586 = vmatpush1.bf16.msra.mxu0 %v1483
    %1587 = vmatprep.subr.bf16.mxu0 0
    %1588 = vmatpush1.bf16.msra.mxu0 %v1484
    %1589 = vmatprep.subr.bf16.mxu0 0
    %1590 = vmatpush1.bf16.msra.mxu0 %v1485
    %1591 = vmatprep.mubr.bf16.mxu0 %v1256
    %1592 = vmatmul.mubr.bf16.gmra.mrb[0].mxu0 %v1255
    %v1593 = vpop.f32.mrb[0].mxu0
    %v1594 = vadd.f32 %v1553, %v1593
    %v1595 = vpop.f32.mrb[0].mxu0
    %v1596 = vpop.f32.mrb[0].mxu0
    %v1597 = vadd.f32 %v1556, %v1596
    %v1598 = vpop.f32.mrb[0].mxu0
    %1599 = vdwg.mxu0
    %v1600 = vadd.f32 %v942, %v1594
    %v1601 = vadd.f32 %v943, %v1597
    %v1602 = vld [vmem:[%s6 + $0x6] sm:$0x1]
    %v1603 = vld [vmem:[%s6 + $0x7] sm:$0x1]
    %1604 = vadd.xlane.f32.xlu0 %v1600
    %v1605 = vpop.xlane.xlu0 %1604
    %1606 = vadd.xlane.f32.xlu0 %v1601
    %v1607 = vpop.xlane.xlu0 %1606
    %v1608 = vmul.f32 %v1605, %v899
    %v1609 = vmul.f32 %v1607, %v899
    %v1610 = vsub.f32 %v1600, %v1608
    %v1611 = vsub.f32 %v1601, %v1609
    %v1612 = vmul.f32 %v1610, %v1610
    %v1613 = vmul.f32 %v1611, %v1611
    %1614 = vadd.xlane.f32.xlu0 %v1612
    %v1615 = vpop.xlane.xlu0 %1614
    %1616 = vadd.xlane.f32.xlu0 %v1613
    %v1617 = vpop.xlane.xlu0 %1616
    %v1618 = vmul.f32 %v1615, 0.007874016
    %v1619 = vmul.f32 %v1617, 0.007874016
    %v1620 = vlaneseq
    %v1621 = vshrl.u32 %v1620, 7
    %v1622 = vsub.s32 0, %v1621
    %v1623 = vrot.slane %v1602, %v1622
    %v1624 = vmul.f32 %v1623, %v1610
    %v1625 = vmul.f32 %v1623, %v1611
    %v1626 = vrsqrt.pop %v1618
    %v1627 = vmul.f32 %v1618, %v1626
    %vm1628 = vcmp.eq.f32.partialorder %v1618, inf
    %v1629 = vsel %vm1628, %v1618, %v1627
    %vm1630 = vcmp.eq.f32.partialorder %v1618, 0.0
    %v1631 = vand.u32 %v1618, 2147483648
    %v1632 = vsel %vm1630, %v1631, %v1629
    %v1633 = vrsqrt.pop %v1619
    %v1634 = vmul.f32 %v1619, %v1633
    %vm1635 = vcmp.eq.f32.partialorder %v1619, inf
    %v1636 = vsel %vm1635, %v1619, %v1634
    %vm1637 = vcmp.eq.f32.partialorder %v1619, 0.0
    %v1638 = vand.u32 %v1619, 2147483648
    %v1639 = vsel %vm1637, %v1638, %v1636
    %v1640 = vadd.f32 %v1632, 1e-06
    %v1641 = vadd.f32 %v1639, 1e-06
    %v1642 = vrcp.pop %v1640
    %v1643 = vmul.f32 %v1624, %v1642
    %v1644 = vrcp.pop %v1641
    %v1645 = vmul.f32 %v1625, %v1644
    %v1646 = vlaneseq
    %v1647 = vshrl.u32 %v1646, 7
    %v1648 = vsub.s32 0, %v1647
    %v1649 = vrot.slane %v1603, %v1648
    %v1650 = vadd.f32 %v1643, %v1649
    %v1651 = vadd.f32 %v1645, %v1649
    %1652 = vst [vmem:[#allocation8] sm:$0xff] %v1650
    %1653 = vst [vmem:[#allocation8 + $0x8] sm:$0xff] %v1651
    // Predicated region
    $region46: #{sa_forward.1} parent=1 // pred_check
      _
    $region47: #{sa_forward.1} parent=1 // pred_check_branch
      %1655 = sbr.rel (0) target = $region49
    $region48: #{sa_forward.1} parent=1 // pred_region
      %s1657 = ssub.s32 256, 256
      %1658 = vsyncadd [#allocation4], %s1657
      %s1659 = sshll.u32 [#allocation8], 4
      %s1660 = int_to_ptr.vmem [resolvable:$true] %s1659
      %1665 = dma.vmem_to_hbm [thread:$0]  %s1660, 256, %s8, [#allocation4], 128, 128, 8
    $region49: #{sa_forward.1} parent=1 // pred_fallthru
      _
    // Predicated region
    $region50: #{sa_forward.1} parent=1 // pred_check
      _
    $region51: #{sa_forward.1} parent=1 // pred_check_branch
      %1667 = sbr.rel (0) target = $region53
    $region52: #{sa_forward.1} parent=1 // pred_region
      %1668 = dma.done [#allocation4], 256
    $region53: #{sa_forward.1} parent=1 // pred_fallthru
      _
    %1669 = vsyncpa [#allocation3], 1
    %1670 = vsyncpa [#allocation6], 1
    %1671 = vsyncpa [#allocation4], 1

</llo_original>
